<compile_context>
chip_gen: v7x
topology: tpu7x:2x2x1
jax: 0.10.0
libtpu: 0.0.40
codegen_flags: <defaults>
</compile_context>

<pallas_src>
import jax
import jax.numpy as jnp
from jax.experimental import pallas as pl
from jax.experimental.pallas import tpu as pltpu

# ---------------- configuration (GraphFeatureExtractorConfig analogue) ----------------
NUM_NODE_FEATURES = 32      # config.initial_node_feature_dim
HIDDEN_DIM        = 128     # config.gnn_config.hidden_dim
NUM_LAYERS        = 2       # config.gnn_config.num_layers
NUM_EDGE_TYPES    = 3       # len(input.adjacency_lists)
OUTPUT_DIM        = 128     # config.readout_config.output_dim
USE_ALL_STATES    = True    # config.readout_config.use_all_states
READOUT_NODE_DIM  = (NUM_LAYERS + 1) * HIDDEN_DIM if USE_ALL_STATES else HIDDEN_DIM
LN_EPS            = 1e-5

FEAT_PAD          = 128     # pad F -> 128 lanes (unmasked loads / full MXU K)
NODE_TILE         = 128     # target-node row tile (grid axis)
NODE_PAD_MULT     = 128     # pad N to a multiple of 128 (adjacency lane dim)
GRAPH_PAD_MULT    = 16      # pad G to a multiple of 16 (bf16 sublane packing)


def _round_up(x, m):
    return ((x + m - 1) // m) * m


def _pad_to(a, shape):
    return jnp.pad(a, [(0, s - d) for d, s in zip(a.shape, shape)])


def _vmem_limit_bytes():
    """Generation-aware VMEM limit: headroom below physical capacity."""
    cap = None
    try:
        cap = getattr(pltpu.get_tpu_info(), "vmem_capacity_bytes", None)
    except Exception:
        cap = None
    if cap is None:
        cap = 64 << 20  # conservative fallback (works on every generation)
    return (48 << 20) if cap <= (64 << 20) else (100 << 20)


# ---------------------------------- Pallas kernels ----------------------------------
def _proj_kernel(x_ref, w_ref, h_ref):
    # init_node_proj (Linear, no bias): bf16 operands, f32 accumulation.
    h_ref[...] = jnp.dot(x_ref[...], w_ref[...],
                         preferred_element_type=jnp.float32).astype(jnp.bfloat16)


def _edge_transform_kernel(h_ref, w_edge_ref, he_ref):
    # One wide [tile, H] @ [H, E*H] matmul per row tile (computed once per layer).
    he_ref[...] = jnp.dot(h_ref[...], w_edge_ref[...],
                          preferred_element_type=jnp.float32).astype(jnp.bfloat16)


def _message_kernel(h_ref, he_ref, adj_ref, w_self_ref, h_out_ref):
    # One target-node row tile: msg = h_tile W_self + sum_e A_e[tile,:] he_e ; relu.
    H = HIDDEN_DIM
    msg = jnp.dot(h_ref[...], w_self_ref[...], preferred_element_type=jnp.float32)
    for e in range(NUM_EDGE_TYPES):
        # Adjacency streamed int8 from HBM; upcast to bf16 on the VPU just before
        # the MXU dot (values are exactly 0/1 -> lossless).
        adj_e = adj_ref[e].astype(jnp.float32).astype(jnp.bfloat16)       # [tile, Np]
        msg = msg + jnp.dot(adj_e, he_ref[:, e * H:(e + 1) * H],
                            preferred_element_type=jnp.float32)
    h_out_ref[...] = jnp.maximum(msg, 0.0).astype(jnp.bfloat16)


def _readout_kernel(pool_ref, *refs):
    # Readout + LayerNorm (tiny; un-gridded, fully VMEM-resident).
    h_refs = refs[:NUM_LAYERS + 1]
    w_read_ref, b_read_ref, gamma_ref, beta_ref, out_ref = refs[NUM_LAYERS + 1:]
    pool = pool_ref[...]                                                   # [Gp, Np] bf16
    used = h_refs if USE_ALL_STATES else h_refs[-1:]
    pooled = [jnp.dot(pool, hr[...], preferred_element_type=jnp.float32) for hr in used]
    pooled_all = jnp.concatenate(pooled, axis=-1).astype(jnp.bfloat16)     # [Gp, RD]
    mol = jnp.dot(pooled_all, w_read_ref[...],
                  preferred_element_type=jnp.float32) + b_read_ref[...]    # [Gp, D_out]
    # final_norm_layer = LayerNorm(output_dim). Padded graph rows are bias-only
    # constants -> var=0 -> rsqrt(eps): finite, and sliced off by the caller.
    mean = jnp.mean(mol, axis=-1, keepdims=True)
    var = jnp.mean((mol - mean) ** 2, axis=-1, keepdims=True)
    mol = (mol - mean) * jax.lax.rsqrt(var + LN_EPS)
    out_ref[...] = mol * gamma_ref[...] + beta_ref[...]


# ------------------------------------ wrapper ------------------------------------
@jax.jit
def graph_feature_extractor(x_p, adj_i8, pool_p, kparams):
    """Full GraphFeatureExtractorM forward on padded, kernel-ready inputs."""
    n_pad = x_p.shape[0]
    g_pad = pool_p.shape[0]
    H, E, L = HIDDEN_DIM, NUM_EDGE_TYPES, NUM_LAYERS
    grid = (n_pad // NODE_TILE,)
    vmem_limit = _vmem_limit_bytes()
    row_params = pltpu.CompilerParams(dimension_semantics=("parallel",),
                                      vmem_limit_bytes=vmem_limit)

    # 1. init_node_proj
    h = pl.pallas_call(
        _proj_kernel,
        out_shape=jax.ShapeDtypeStruct((n_pad, H), jnp.bfloat16),
        grid=grid,
        in_specs=[pl.BlockSpec((NODE_TILE, FEAT_PAD), lambda i: (i, 0)),
                  pl.BlockSpec((FEAT_PAD, H), lambda i: (0, 0))],
        out_specs=pl.BlockSpec((NODE_TILE, H), lambda i: (i, 0)),
        compiler_params=row_params,
    )(x_p, kparams["w_proj"])

    hs = [h]
    msg_cost = pl.CostEstimate(
        flops=2 * n_pad * H * H + 2 * E * n_pad * n_pad * H,
        transcendentals=0,
        bytes_accessed=(E * n_pad * n_pad            # int8 adjacency (dominant)
                        + n_pad * H * 2              # h tiles (bf16)
                        + n_pad * E * H * 2          # he (bf16)
                        + H * H * 2                  # w_self (bf16)
                        + n_pad * H * 2))            # output (bf16)

    # 2. GNN message-passing layers (static unroll; L small & known at trace time)
    for l in range(L):
        he = pl.pallas_call(
            _edge_transform_kernel,
            out_shape=jax.ShapeDtypeStruct((n_pad, E * H), jnp.bfloat16),
            grid=grid,
            in_specs=[pl.BlockSpec((NODE_TILE, H), lambda i: (i, 0)),
                      pl.BlockSpec((H, E * H), lambda i: (0, 0))],
            out_specs=pl.BlockSpec((NODE_TILE, E * H), lambda i: (i, 0)),
            compiler_params=row_params,
        )(h, kparams["w_edge_all"][l])

        h = pl.pallas_call(
            _message_kernel,
            out_shape=jax.ShapeDtypeStruct((n_pad, H), jnp.bfloat16),
            grid=grid,
            in_specs=[
                pl.BlockSpec((NODE_TILE, H), lambda i: (i, 0)),            # h tile (self)
                pl.BlockSpec((n_pad, E * H), lambda i: (0, 0)),            # he, resident
                pl.BlockSpec((E, NODE_TILE, n_pad), lambda i: (0, i, 0)),  # adj slab, int8
                pl.BlockSpec((H, H), lambda i: (0, 0)),                    # w_self
            ],
            out_specs=pl.BlockSpec((NODE_TILE, H), lambda i: (i, 0)),
            compiler_params=row_params,
            cost_estimate=msg_cost,
        )(h, he, adj_i8, kparams["w_self"][l])
        hs.append(h)

    # 3+4. readout (sum-pool + linear) + LayerNorm — tiny, single un-gridded call.
    vmem = pl.BlockSpec(memory_space=pltpu.MemorySpace.VMEM)
    out = pl.pallas_call(
        _readout_kernel,
        out_shape=jax.ShapeDtypeStruct((g_pad, OUTPUT_DIM), jnp.float32),
        in_specs=[vmem] * (1 + (L + 1) + 4),
        out_specs=vmem,
        compiler_params=pltpu.CompilerParams(vmem_limit_bytes=vmem_limit),
    )(pool_p, *hs, kparams["w_read"], kparams["b_read"],
      kparams["ln_gamma"], kparams["ln_beta"])
    return out


# -------------------------- host-side prep (hoisted, per-batch) --------------------------
def prepare_batch(node_features, adj_dense, node_to_graph, num_graphs):
    n_nodes = node_features.shape[0]
    n_pad = _round_up(max(n_nodes, NODE_PAD_MULT), NODE_PAD_MULT)
    g_pad = _round_up(max(num_graphs, GRAPH_PAD_MULT), GRAPH_PAD_MULT)

    # Zero padding is semantics-preserving: bias-free proj + zero adjacency rows/cols
    # keep padded node states at exactly 0; padded pool columns are 0.
    x_p = _pad_to(node_features.astype(jnp.float32),
                  (n_pad, FEAT_PAD)).astype(jnp.bfloat16)
    adj_i8 = _pad_to(adj_dense, (NUM_EDGE_TYPES, n_pad, n_pad)).astype(jnp.int8)
    pool = jax.nn.one_hot(node_to_graph, num_graphs, dtype=jnp.float32).T
    pool_p = _pad_to(pool, (g_pad, n_pad)).astype(jnp.bfloat16)
    return x_p, adj_i8, pool_p


def prepare_params(raw):
    """Fuse/cast weights once (hoisted out of the per-call hot path)."""
    # [L, E, Hin, Hout] -> [L, Hin, E*Hout] with column block e == w_edge[l, e].
    w_edge_all = jnp.transpose(raw["w_edge"], (0, 2, 1, 3)).reshape(
        NUM_LAYERS, HIDDEN_DIM, NUM_EDGE_TYPES * HIDDEN_DIM)
    return {
        "w_proj": _pad_to(raw["w_proj"], (FEAT_PAD, HIDDEN_DIM)).astype(jnp.bfloat16),
        "w_self": raw["w_self"].astype(jnp.bfloat16),
        "w_edge_all": w_edge_all.astype(jnp.bfloat16),
        "w_read": raw["w_read"].astype(jnp.bfloat16),
        "b_read": raw["b_read"],
        "ln_gamma": raw["ln_gamma"],
        "ln_beta": raw["ln_beta"],
    }


# ----------------------------- deterministic parameters -----------------------------
def init_params(key):
    ks = jax.random.split(key, 4)
    scale_proj = 1.0 / jnp.sqrt(NUM_NODE_FEATURES)
    scale_h = 1.0 / jnp.sqrt(HIDDEN_DIM)
    scale_rd = 1.0 / jnp.sqrt(READOUT_NODE_DIM)
    return {
        "w_proj": scale_proj * jax.random.normal(
            ks[0], (NUM_NODE_FEATURES, HIDDEN_DIM), jnp.float32),
        "w_self": scale_h * jax.random.normal(
            ks[1], (NUM_LAYERS, HIDDEN_DIM, HIDDEN_DIM), jnp.float32),
        "w_edge": scale_h * jax.random.normal(
            ks[2], (NUM_LAYERS, NUM_EDGE_TYPES, HIDDEN_DIM, HIDDEN_DIM), jnp.float32),
        "w_read": scale_rd * jax.random.normal(
            ks[3], (READOUT_NODE_DIM, OUTPUT_DIM), jnp.float32),
        "b_read": jnp.zeros((1, OUTPUT_DIM), jnp.float32),
        "ln_gamma": jnp.ones((1, OUTPUT_DIM), jnp.float32),
        "ln_beta": jnp.zeros((1, OUTPUT_DIM), jnp.float32),
    }


# ------------------------------ pure-JAX f32 reference ------------------------------
def reference_forward(node_features, adj_dense, node_to_graph, num_graphs, raw):
    h = node_features @ raw["w_proj"]
    hs = [h]
    for l in range(NUM_LAYERS):
        msg = h @ raw["w_self"][l]
        for e in range(NUM_EDGE_TYPES):
            msg = msg + adj_dense[e] @ (h @ raw["w_edge"][l, e])
        h = jnp.maximum(msg, 0.0)
        hs.append(h)
    node_repr = jnp.concatenate(hs, axis=-1) if USE_ALL_STATES else hs[-1]
    pooled = jax.ops.segment_sum(node_repr, node_to_graph, num_graphs)
    mol = pooled @ raw["w_read"] + raw["b_read"]
    mean = mol.mean(-1, keepdims=True)
    var = ((mol - mean) ** 2).mean(-1, keepdims=True)
    mol = (mol - mean) / jnp.sqrt(var + LN_EPS)
    return mol * raw["ln_gamma"] + raw["ln_beta"]


def build_example_batch(key, num_nodes=16, num_graphs=4):
    """Small deterministic FSMolBatch analogue: node features, dense adjacency, graph ids."""
    kx, = jax.random.split(key, 1)
    node_features = jax.random.normal(kx, (num_nodes, NUM_NODE_FEATURES), jnp.float32)

    nodes_per_graph = num_nodes // num_graphs
    node_to_graph = jnp.repeat(jnp.arange(num_graphs, dtype=jnp.int32), nodes_per_graph)

    # Dense adjacency [E, N, N]: ring edges within each graph, one pattern per edge type.
    adj = jnp.zeros((NUM_EDGE_TYPES, num_nodes, num_nodes), jnp.float32)
    for g in range(num_graphs):
        base = g * nodes_per_graph
        for i in range(nodes_per_graph):
            s = base + i
            t = base + (i + 1) % nodes_per_graph
            adj = adj.at[0, t, s].set(1.0)                                 # forward ring
            adj = adj.at[1, s, t].set(1.0)                                 # backward ring
            adj = adj.at[2, s, base + (i + 2) % nodes_per_graph].set(1.0)  # skip edge
    return node_features, adj, node_to_graph


if __name__ == "__main__":
    key = jax.random.PRNGKey(0)
    k_batch, k_params = jax.random.split(key)

    num_nodes, num_graphs = 16, 4
    node_features, adj_dense, node_to_graph = build_example_batch(
        k_batch, num_nodes=num_nodes, num_graphs=num_graphs)
    raw_params = init_params(k_params)

    kparams = prepare_params(raw_params)
    x_p, adj_i8, pool_p = prepare_batch(node_features, adj_dense, node_to_graph, num_graphs)

    mol_full = graph_feature_extractor(x_p, adj_i8, pool_p, kparams)
    jax.block_until_ready(mol_full)
    mol_repr = mol_full[:num_graphs]

    ref = reference_forward(node_features, adj_dense, node_to_graph, num_graphs, raw_params)
    max_err = float(jnp.max(jnp.abs(mol_repr - ref)))

    assert mol_repr.shape == (num_graphs, OUTPUT_DIM)
    assert jnp.all(jnp.isfinite(mol_repr))
    assert max_err < 0.25, f"kernel vs f32 reference max abs err {max_err}"
    print("KERNEL_OK")
</pallas_src>

<mosaic_0001>
module attributes {stable_mosaic.version = 11 : i64} {
  func.func @_proj_kernel(%arg0: i32, %arg1: memref<128x128xbf16, #tpu.memory_space<vmem>>, %arg2: memref<128x128xbf16, #tpu.memory_space<vmem>>, %arg3: memref<128x128xbf16, #tpu.memory_space<vmem>>) attributes {dimension_semantics = [#tpu.dimension_semantics<parallel>], iteration_bounds = array<i64: 1>, scalar_prefetch = 0 : i64, scratch_operands = 0 : i64, tpu.core_type = #tpu.core_type<tc>, window_params = [{transform_indices = @transform_0, window_bounds = array<i64: 128, 128>}, {pipeline_mode = #tpu.pipeline_mode<synchronous>, transform_indices = @transform_1, window_bounds = array<i64: 128, 128>}, {transform_indices = @transform_2, window_bounds = array<i64: 128, 128>}]} {
    %c0 = arith.constant 0 : index
    %c0_0 = arith.constant 0 : index
    %0 = vector.load %arg1[%c0, %c0_0] : memref<128x128xbf16, #tpu.memory_space<vmem>>, vector<128x128xbf16>
    %c0_1 = arith.constant 0 : index
    %c0_2 = arith.constant 0 : index
    %1 = vector.load %arg2[%c0_1, %c0_2] : memref<128x128xbf16, #tpu.memory_space<vmem>>, vector<128x128xbf16>
    %cst = arith.constant dense<0.000000e+00> : vector<128x128xf32>
    %2 = tpu.matmul %0, %1, %cst {dimension_numbers = #tpu.dot_dimension_numbers<[1], [0], [0], [1], [0, 0, 1, 1], [], []>} : vector<128x128xbf16>, vector<128x128xbf16>, vector<128x128xf32> -> vector<128x128xf32>
    %3 = arith.truncf %2 : vector<128x128xf32> to vector<128x128xbf16>
    %c0_3 = arith.constant 0 : index
    %c0_4 = arith.constant 0 : index
    %4 = vector.load %arg3[%c0_3, %c0_4] : memref<128x128xbf16, #tpu.memory_space<vmem>>, vector<128x128xbf16>
    tpu.vector_store %arg3[%c0_3, %c0_4], %3 {strides = array<i32>} : memref<128x128xbf16, #tpu.memory_space<vmem>>, vector<128x128xbf16>,
    return
  }
  func.func @transform_0(%arg0: i32) -> (i32, i32) {
    %c0_i32 = arith.constant 0 : i32
    %c0_i32_0 = arith.constant 0 : i32
    return %arg0, %c0_i32 : i32, i32
  }
  func.func @transform_1(%arg0: i32) -> (i32, i32) {
    %c0_i32 = arith.constant 0 : i32
    %c0_i32_0 = arith.constant 0 : i32
    %c0_i32_1 = arith.constant 0 : i32
    return %c0_i32, %c0_i32_0 : i32, i32
  }
  func.func @transform_2(%arg0: i32) -> (i32, i32) {
    %c0_i32 = arith.constant 0 : i32
    %c0_i32_0 = arith.constant 0 : i32
    return %arg0, %c0_i32 : i32, i32
  }
}

module attributes {stable_mosaic.version = 11 : i64} {
  func.func @_edge_transform_kernel(%arg0: i32, %arg1: memref<128x128xbf16, #tpu.memory_space<vmem>>, %arg2: memref<128x384xbf16, #tpu.memory_space<vmem>>, %arg3: memref<128x384xbf16, #tpu.memory_space<vmem>>) attributes {dimension_semantics = [#tpu.dimension_semantics<parallel>], iteration_bounds = array<i64: 1>, scalar_prefetch = 0 : i64, scratch_operands = 0 : i64, tpu.core_type = #tpu.core_type<tc>, window_params = [{transform_indices = @transform_0, window_bounds = array<i64: 128, 128>}, {pipeline_mode = #tpu.pipeline_mode<synchronous>, transform_indices = @transform_1, window_bounds = array<i64: 128, 384>}, {transform_indices = @transform_2, window_bounds = array<i64: 128, 384>}]} {
    %c0 = arith.constant 0 : index
    %c0_0 = arith.constant 0 : index
    %0 = vector.load %arg1[%c0, %c0_0] : memref<128x128xbf16, #tpu.memory_space<vmem>>, vector<128x128xbf16>
    %c0_1 = arith.constant 0 : index
    %c0_2 = arith.constant 0 : index
    %1 = vector.load %arg2[%c0_1, %c0_2] : memref<128x384xbf16, #tpu.memory_space<vmem>>, vector<128x384xbf16>
    %cst = arith.constant dense<0.000000e+00> : vector<128x384xf32>
    %2 = tpu.matmul %0, %1, %cst {dimension_numbers = #tpu.dot_dimension_numbers<[1], [0], [0], [1], [0, 0, 1, 1], [], []>} : vector<128x128xbf16>, vector<128x384xbf16>, vector<128x384xf32> -> vector<128x384xf32>
    %3 = arith.truncf %2 : vector<128x384xf32> to vector<128x384xbf16>
    %c0_3 = arith.constant 0 : index
    %c0_4 = arith.constant 0 : index
    %4 = vector.load %arg3[%c0_3, %c0_4] : memref<128x384xbf16, #tpu.memory_space<vmem>>, vector<128x384xbf16>
    tpu.vector_store %arg3[%c0_3, %c0_4], %3 {strides = array<i32>} : memref<128x384xbf16, #tpu.memory_space<vmem>>, vector<128x384xbf16>,
    return
  }
  func.func @transform_0(%arg0: i32) -> (i32, i32) {
    %c0_i32 = arith.constant 0 : i32
    %c0_i32_0 = arith.constant 0 : i32
    return %arg0, %c0_i32 : i32, i32
  }
  func.func @transform_1(%arg0: i32) -> (i32, i32) {
    %c0_i32 = arith.constant 0 : i32
    %c0_i32_0 = arith.constant 0 : i32
    %c0_i32_1 = arith.constant 0 : i32
    return %c0_i32, %c0_i32_0 : i32, i32
  }
  func.func @transform_2(%arg0: i32) -> (i32, i32) {
    %c0_i32 = arith.constant 0 : i32
    %c0_i32_0 = arith.constant 0 : i32
    return %arg0, %c0_i32 : i32, i32
  }
}

module attributes {stable_mosaic.version = 11 : i64} {
  func.func @_readout_kernel(%arg0: memref<16x128xbf16, #tpu.memory_space<vmem>>, %arg1: memref<128x128xbf16, #tpu.memory_space<vmem>>, %arg2: memref<128x128xbf16, #tpu.memory_space<vmem>>, %arg3: memref<128x128xbf16, #tpu.memory_space<vmem>>, %arg4: memref<384x128xbf16, #tpu.memory_space<vmem>>, %arg5: memref<1x128xf32, #tpu.memory_space<vmem>>, %arg6: memref<1x128xf32, #tpu.memory_space<vmem>>, %arg7: memref<1x128xf32, #tpu.memory_space<vmem>>, %arg8: memref<16x128xf32, #tpu.memory_space<vmem>>) attributes {dimension_semantics = [], scalar_prefetch = 0 : i64, scratch_operands = 0 : i64, tpu.core_type = #tpu.core_type<tc>} {
    %c0 = arith.constant 0 : index
    %c0_0 = arith.constant 0 : index
    %0 = vector.load %arg0[%c0, %c0_0] : memref<16x128xbf16, #tpu.memory_space<vmem>>, vector<16x128xbf16>
    %c0_1 = arith.constant 0 : index
    %c0_2 = arith.constant 0 : index
    %1 = vector.load %arg1[%c0_1, %c0_2] : memref<128x128xbf16, #tpu.memory_space<vmem>>, vector<128x128xbf16>
    %cst = arith.constant dense<0.000000e+00> : vector<16x128xf32>
    %2 = tpu.matmul %0, %1, %cst {dimension_numbers = #tpu.dot_dimension_numbers<[1], [0], [0], [1], [0, 0, 1, 1], [], []>} : vector<16x128xbf16>, vector<128x128xbf16>, vector<16x128xf32> -> vector<16x128xf32>
    %c0_3 = arith.constant 0 : index
    %c0_4 = arith.constant 0 : index
    %3 = vector.load %arg2[%c0_3, %c0_4] : memref<128x128xbf16, #tpu.memory_space<vmem>>, vector<128x128xbf16>
    %cst_5 = arith.constant dense<0.000000e+00> : vector<16x128xf32>
    %4 = tpu.matmul %0, %3, %cst_5 {dimension_numbers = #tpu.dot_dimension_numbers<[1], [0], [0], [1], [0, 0, 1, 1], [], []>} : vector<16x128xbf16>, vector<128x128xbf16>, vector<16x128xf32> -> vector<16x128xf32>
    %c0_6 = arith.constant 0 : index
    %c0_7 = arith.constant 0 : index
    %5 = vector.load %arg3[%c0_6, %c0_7] : memref<128x128xbf16, #tpu.memory_space<vmem>>, vector<128x128xbf16>
    %cst_8 = arith.constant dense<0.000000e+00> : vector<16x128xf32>
    %6 = tpu.matmul %0, %5, %cst_8 {dimension_numbers = #tpu.dot_dimension_numbers<[1], [0], [0], [1], [0, 0, 1, 1], [], []>} : vector<16x128xbf16>, vector<128x128xbf16>, vector<16x128xf32> -> vector<16x128xf32>
    %7 = tpu.concatenate %2, %4, %6 in 1 : vector<16x128xf32>, vector<16x128xf32>, vector<16x128xf32> -> vector<16x384xf32>
    %8 = arith.truncf %7 : vector<16x384xf32> to vector<16x384xbf16>
    %c0_9 = arith.constant 0 : index
    %c0_10 = arith.constant 0 : index
    %9 = vector.load %arg4[%c0_9, %c0_10] : memref<384x128xbf16, #tpu.memory_space<vmem>>, vector<384x128xbf16>
    %cst_11 = arith.constant dense<0.000000e+00> : vector<16x128xf32>
    %10 = tpu.matmul %8, %9, %cst_11 {dimension_numbers = #tpu.dot_dimension_numbers<[1], [0], [0], [1], [0, 0, 1, 1], [], []>} : vector<16x384xbf16>, vector<384x128xbf16>, vector<16x128xf32> -> vector<16x128xf32>
    %c0_12 = arith.constant 0 : index
    %c0_13 = arith.constant 0 : index
    %11 = vector.load %arg5[%c0_12, %c0_13] : memref<1x128xf32, #tpu.memory_space<vmem>>, vector<1x128xf32>
    %12 = vector.broadcast %11 : vector<1x128xf32> to vector<16x128xf32>
    %13 = arith.addf %10, %12 : vector<16x128xf32>
    %cst_14 = arith.constant dense<0.000000e+00> : vector<16xf32>
    %14 = vector.multi_reduction <add>, %13, %cst_14 [1] : vector<16x128xf32> to vector<16xf32>
    %15 = vector.shape_cast %14 : vector<16xf32> to vector<16x1xf32>
    %cst_15 = arith.constant 1.280000e+02 : f32
    %16 = vector.broadcast %cst_15 : f32 to vector<16x1xf32>
    %17 = arith.divf %15, %16 : vector<16x1xf32>
    %18 = vector.broadcast %17 : vector<16x1xf32> to vector<16x128xf32>
    %19 = arith.subf %13, %18 : vector<16x128xf32>
    %20 = arith.mulf %19, %19 : vector<16x128xf32>
    %cst_16 = arith.constant dense<0.000000e+00> : vector<16xf32>
    %21 = vector.multi_reduction <add>, %20, %cst_16 [1] : vector<16x128xf32> to vector<16xf32>
    %22 = vector.shape_cast %21 : vector<16xf32> to vector<16x1xf32>
    %cst_17 = arith.constant 1.280000e+02 : f32
    %23 = vector.broadcast %cst_17 : f32 to vector<16x1xf32>
    %24 = arith.divf %22, %23 : vector<16x1xf32>
    %25 = vector.broadcast %17 : vector<16x1xf32> to vector<16x128xf32>
    %26 = arith.subf %13, %25 : vector<16x128xf32>
    %cst_18 = arith.constant 9.99999974E-6 : f32
    %27 = vector.broadcast %cst_18 : f32 to vector<16x1xf32>
    %28 = arith.addf %24, %27 : vector<16x1xf32>
    %29 = math.rsqrt %28 : vector<16x1xf32>
    %30 = vector.broadcast %29 : vector<16x1xf32> to vector<16x128xf32>
    %31 = arith.mulf %26, %30 : vector<16x128xf32>
    %c0_19 = arith.constant 0 : index
    %c0_20 = arith.constant 0 : index
    %32 = vector.load %arg6[%c0_19, %c0_20] : memref<1x128xf32, #tpu.memory_space<vmem>>, vector<1x128xf32>
    %33 = vector.broadcast %32 : vector<1x128xf32> to vector<16x128xf32>
    %34 = arith.mulf %31, %33 : vector<16x128xf32>
    %c0_21 = arith.constant 0 : index
    %c0_22 = arith.constant 0 : index
    %35 = vector.load %arg7[%c0_21, %c0_22] : memref<1x128xf32, #tpu.memory_space<vmem>>, vector<1x128xf32>
    %36 = vector.broadcast %35 : vector<1x128xf32> to vector<16x128xf32>
    %37 = arith.addf %34, %36 : vector<16x128xf32>
    %c0_23 = arith.constant 0 : index
    %c0_24 = arith.constant 0 : index
    %38 = vector.load %arg8[%c0_23, %c0_24] : memref<16x128xf32, #tpu.memory_space<vmem>>, vector<16x128xf32>
    tpu.vector_store %arg8[%c0_23, %c0_24], %37 {strides = array<i32>} : memref<16x128xf32, #tpu.memory_space<vmem>>, vector<16x128xf32>,
    return
  }
}

module attributes {stable_mosaic.version = 11 : i64} {
  func.func @_message_kernel(%arg0: i32, %arg1: memref<128x128xbf16, #tpu.memory_space<vmem>>, %arg2: memref<128x384xbf16, #tpu.memory_space<vmem>>, %arg3: memref<3x128x128xi8, #tpu.memory_space<vmem>>, %arg4: memref<128x128xbf16, #tpu.memory_space<vmem>>, %arg5: memref<128x128xbf16, #tpu.memory_space<vmem>>) attributes {dimension_semantics = [#tpu.dimension_semantics<parallel>], iteration_bounds = array<i64: 1>, scalar_prefetch = 0 : i64, scratch_operands = 0 : i64, tpu.core_type = #tpu.core_type<tc>, window_params = [{transform_indices = @transform_0, window_bounds = array<i64: 128, 128>}, {pipeline_mode = #tpu.pipeline_mode<synchronous>, transform_indices = @transform_1, window_bounds = array<i64: 128, 384>}, {transform_indices = @transform_2, window_bounds = array<i64: 3, 128, 128>}, {pipeline_mode = #tpu.pipeline_mode<synchronous>, transform_indices = @transform_3, window_bounds = array<i64: 128, 128>}, {transform_indices = @transform_4, window_bounds = array<i64: 128, 128>}]} {
    %c0 = arith.constant 0 : index
    %c0_0 = arith.constant 0 : index
    %0 = vector.load %arg1[%c0, %c0_0] : memref<128x128xbf16, #tpu.memory_space<vmem>>, vector<128x128xbf16>
    %c0_1 = arith.constant 0 : index
    %c0_2 = arith.constant 0 : index
    %1 = vector.load %arg4[%c0_1, %c0_2] : memref<128x128xbf16, #tpu.memory_space<vmem>>, vector<128x128xbf16>
    %cst = arith.constant dense<0.000000e+00> : vector<128x128xf32>
    %2 = tpu.matmul %0, %1, %cst {dimension_numbers = #tpu.dot_dimension_numbers<[1], [0], [0], [1], [0, 0, 1, 1], [], []>} : vector<128x128xbf16>, vector<128x128xbf16>, vector<128x128xf32> -> vector<128x128xf32>
    %c0_3 = arith.constant 0 : index
    %c0_4 = arith.constant 0 : index
    %c0_5 = arith.constant 0 : index
    %3 = vector.load %arg3[%c0_3, %c0_4, %c0_5] : memref<3x128x128xi8, #tpu.memory_space<vmem>>, vector<1x128x128xi8>
    %4 = vector.shape_cast %3 : vector<1x128x128xi8> to vector<128x128xi8>
    %5 = arith.sitofp %4 : vector<128x128xi8> to vector<128x128xf32>
    %6 = arith.truncf %5 : vector<128x128xf32> to vector<128x128xbf16>
    %c0_6 = arith.constant 0 : index
    %c0_7 = arith.constant 0 : index
    %7 = vector.load %arg2[%c0_6, %c0_7] : memref<128x384xbf16, #tpu.memory_space<vmem>>, vector<128x128xbf16>
    %cst_8 = arith.constant dense<0.000000e+00> : vector<128x128xf32>
    %8 = tpu.matmul %6, %7, %cst_8 {dimension_numbers = #tpu.dot_dimension_numbers<[1], [0], [0], [1], [0, 0, 1, 1], [], []>} : vector<128x128xbf16>, vector<128x128xbf16>, vector<128x128xf32> -> vector<128x128xf32>
    %9 = arith.addf %2, %8 : vector<128x128xf32>
    %c1 = arith.constant 1 : index
    %c0_9 = arith.constant 0 : index
    %c0_10 = arith.constant 0 : index
    %10 = vector.load %arg3[%c1, %c0_9, %c0_10] : memref<3x128x128xi8, #tpu.memory_space<vmem>>, vector<1x128x128xi8>
    %11 = vector.shape_cast %10 : vector<1x128x128xi8> to vector<128x128xi8>
    %12 = arith.sitofp %11 : vector<128x128xi8> to vector<128x128xf32>
    %13 = arith.truncf %12 : vector<128x128xf32> to vector<128x128xbf16>
    %c0_11 = arith.constant 0 : index
    %c128 = arith.constant 128 : index
    %14 = vector.load %arg2[%c0_11, %c128] : memref<128x384xbf16, #tpu.memory_space<vmem>>, vector<128x128xbf16>
    %cst_12 = arith.constant dense<0.000000e+00> : vector<128x128xf32>
    %15 = tpu.matmul %13, %14, %cst_12 {dimension_numbers = #tpu.dot_dimension_numbers<[1], [0], [0], [1], [0, 0, 1, 1], [], []>} : vector<128x128xbf16>, vector<128x128xbf16>, vector<128x128xf32> -> vector<128x128xf32>
    %16 = arith.addf %9, %15 : vector<128x128xf32>
    %c2 = arith.constant 2 : index
    %c0_13 = arith.constant 0 : index
    %c0_14 = arith.constant 0 : index
    %17 = vector.load %arg3[%c2, %c0_13, %c0_14] : memref<3x128x128xi8, #tpu.memory_space<vmem>>, vector<1x128x128xi8>
    %18 = vector.shape_cast %17 : vector<1x128x128xi8> to vector<128x128xi8>
    %19 = arith.sitofp %18 : vector<128x128xi8> to vector<128x128xf32>
    %20 = arith.truncf %19 : vector<128x128xf32> to vector<128x128xbf16>
    %c0_15 = arith.constant 0 : index
    %c256 = arith.constant 256 : index
    %21 = vector.load %arg2[%c0_15, %c256] : memref<128x384xbf16, #tpu.memory_space<vmem>>, vector<128x128xbf16>
    %cst_16 = arith.constant dense<0.000000e+00> : vector<128x128xf32>
    %22 = tpu.matmul %20, %21, %cst_16 {dimension_numbers = #tpu.dot_dimension_numbers<[1], [0], [0], [1], [0, 0, 1, 1], [], []>} : vector<128x128xbf16>, vector<128x128xbf16>, vector<128x128xf32> -> vector<128x128xf32>
    %23 = arith.addf %16, %22 : vector<128x128xf32>
    %cst_17 = arith.constant 0.000000e+00 : f32
    %24 = vector.broadcast %cst_17 : f32 to vector<128x128xf32>
    %25 = arith.maximumf %23, %24 : vector<128x128xf32>
    %26 = arith.truncf %25 : vector<128x128xf32> to vector<128x128xbf16>
    %c0_18 = arith.constant 0 : index
    %c0_19 = arith.constant 0 : index
    %27 = vector.load %arg5[%c0_18, %c0_19] : memref<128x128xbf16, #tpu.memory_space<vmem>>, vector<128x128xbf16>
    tpu.vector_store %arg5[%c0_18, %c0_19], %26 {strides = array<i32>} : memref<128x128xbf16, #tpu.memory_space<vmem>>, vector<128x128xbf16>,
    return
  }
  func.func @transform_0(%arg0: i32) -> (i32, i32) {
    %c0_i32 = arith.constant 0 : i32
    %c0_i32_0 = arith.constant 0 : i32
    return %arg0, %c0_i32 : i32, i32
  }
  func.func @transform_1(%arg0: i32) -> (i32, i32) {
    %c0_i32 = arith.constant 0 : i32
    %c0_i32_0 = arith.constant 0 : i32
    %c0_i32_1 = arith.constant 0 : i32
    return %c0_i32, %c0_i32_0 : i32, i32
  }
  func.func @transform_2(%arg0: i32) -> (i32, i32, i32) {
    %c0_i32 = arith.constant 0 : i32
    %c0_i32_0 = arith.constant 0 : i32
    %c0_i32_1 = arith.constant 0 : i32
    return %c0_i32, %arg0, %c0_i32_0 : i32, i32, i32
  }
  func.func @transform_3(%arg0: i32) -> (i32, i32) {
    %c0_i32 = arith.constant 0 : i32
    %c0_i32_0 = arith.constant 0 : i32
    %c0_i32_1 = arith.constant 0 : i32
    return %c0_i32, %c0_i32_0 : i32, i32
  }
  func.func @transform_4(%arg0: i32) -> (i32, i32) {
    %c0_i32 = arith.constant 0 : i32
    %c0_i32_0 = arith.constant 0 : i32
    return %arg0, %c0_i32 : i32, i32
  }
}

</mosaic_0001>

<llo_original>
// kernel: graph_feature_extractor.6
$region0: #{graph_feature_extractor.6}
  #allocation0 [shape = 'u32[]', space=smem, size = 0x4, offset = 0x4, fixed_abs, tag = 'smem constant byte address 0x4 - core index']
  #allocation1 [shape = 'u32[144,128]{1,0:T(1,128)}', space=vmem, size = 0x12000, scoped, tag = 'internal scratch']
  %s0 = inlined_call_operand.hbm [shape: bf16[128,128], index: 0, kind: input, shape index: {}]
  %s1 = inlined_call_operand.hbm [shape: bf16[128,128], index: 1, kind: input, shape index: {}]
  %s2 = inlined_call_operand.vmem [shape: bf16[128,128], index: 2, kind: output, shape index: {}]
  %s3 = sld [smem:[#allocation0]]
  $region26: #{graph_feature_extractor.6} parent=0
    _
  %s5 = ssub.s32 1, %s3
  %s6 = scalar_select 0, %s5, %s3
  $region1: #{graph_feature_extractor.6} parent=0
    #allocation2 [shape = 'u8[32768]{0}', space=vmem, size = 0x8000, scoped, tag = 'input window, operand 0, single buffered']
    #allocation3 [shape = 's32[1]{0}', space=sflag, size = 0x4, scoped, tag = 'scoped memory for graph_feature_extractor.6']
    #allocation4 [shape = 'u8[32768]{0}', space=vmem, size = 0x8000, scoped, tag = 'input window, operand 1, single buffered']
    #allocation5 [shape = 's32[1]{0}', space=sflag, size = 0x4, scoped, tag = 'scoped memory for graph_feature_extractor.6']
    %7 = vsyncpa [#allocation3], 0
    %8 = vsyncpa [#allocation5], 0
    // Predicated region
    $region2: #{graph_feature_extractor.6} parent=1 // pred_check
      _
    $region3: #{graph_feature_extractor.6} parent=1 // pred_check_branch
      %10 = sbr.rel (0) target = $region5
    $region4: #{graph_feature_extractor.6} parent=1 // pred_region
      %s12 = ssub.s32 1024, 1024
      %13 = vsyncadd [#allocation3], %s12
      %s14 = sshll.u32 [#allocation2], 4
      %s15 = int_to_ptr.vmem [resolvable:$true] %s14
      %20 = dma.hbm_to_vmem [thread:$0]  %s0, 1024, %s15, [#allocation3], 64, 64, 4
    $region5: #{graph_feature_extractor.6} parent=1 // pred_fallthru
      _
    // Predicated region
    $region6: #{graph_feature_extractor.6} parent=1 // pred_check
      _
    $region7: #{graph_feature_extractor.6} parent=1 // pred_check_branch
      %22 = sbr.rel (0) target = $region9
    $region8: #{graph_feature_extractor.6} parent=1 // pred_region
      %s24 = ssub.s32 1024, 1024
      %25 = vsyncadd [#allocation5], %s24
      %s26 = sshll.u32 [#allocation4], 4
      %s27 = int_to_ptr.vmem [resolvable:$true] %s26
      %32 = dma.hbm_to_vmem [thread:$0]  %s1, 1024, %s27, [#allocation5], 64, 64, 4
    $region9: #{graph_feature_extractor.6} parent=1 // pred_fallthru
      _
    // Predicated region
    $region10: #{graph_feature_extractor.6} parent=1 // pred_check
      _
    $region11: #{graph_feature_extractor.6} parent=1 // pred_check_branch
      %34 = sbr.rel (0) target = $region13
    $region12: #{graph_feature_extractor.6} parent=1 // pred_region
      %35 = dma.done [#allocation3], 1024
    $region13: #{graph_feature_extractor.6} parent=1 // pred_fallthru
      _
    // Predicated region
    $region14: #{graph_feature_extractor.6} parent=1 // pred_check
      _
    $region15: #{graph_feature_extractor.6} parent=1 // pred_check_branch
      %37 = sbr.rel (0) target = $region17
    $region16: #{graph_feature_extractor.6} parent=1 // pred_region
      %38 = dma.done [#allocation5], 1024
    $region17: #{graph_feature_extractor.6} parent=1 // pred_fallthru
      _
    %v40 = vld [vmem:[#allocation2] sm:$0xf]
    %v41 = vld [vmem:[#allocation2 + $0x4] sm:$0xf]
    %v42 = vld [vmem:[#allocation2 + $0x8] sm:$0xf]
    %v43 = vld [vmem:[#allocation2 + $0xc] sm:$0xf]
    %v44 = vld [vmem:[#allocation2 + $0x10] sm:$0xf]
    %v45 = vld [vmem:[#allocation2 + $0x14] sm:$0xf]
    %v46 = vld [vmem:[#allocation2 + $0x18] sm:$0xf]
    %v47 = vld [vmem:[#allocation2 + $0x1c] sm:$0xf]
    %v48 = vld [vmem:[#allocation2 + $0x20] sm:$0xf]
    %v49 = vld [vmem:[#allocation2 + $0x24] sm:$0xf]
    %v50 = vld [vmem:[#allocation2 + $0x28] sm:$0xf]
    %v51 = vld [vmem:[#allocation2 + $0x2c] sm:$0xf]
    %v52 = vld [vmem:[#allocation2 + $0x30] sm:$0xf]
    %v53 = vld [vmem:[#allocation2 + $0x34] sm:$0xf]
    %v54 = vld [vmem:[#allocation2 + $0x38] sm:$0xf]
    %v55 = vld [vmem:[#allocation2 + $0x3c] sm:$0xf]
    %v56 = vld [vmem:[#allocation4] sm:$0xf]
    %v57 = vld [vmem:[#allocation4 + $0x4] sm:$0xf]
    %v58 = vld [vmem:[#allocation4 + $0x8] sm:$0xf]
    %v59 = vld [vmem:[#allocation4 + $0xc] sm:$0xf]
    %v60 = vld [vmem:[#allocation4 + $0x10] sm:$0xf]
    %v61 = vld [vmem:[#allocation4 + $0x14] sm:$0xf]
    %v62 = vld [vmem:[#allocation4 + $0x18] sm:$0xf]
    %v63 = vld [vmem:[#allocation4 + $0x1c] sm:$0xf]
    %v64 = vld [vmem:[#allocation4 + $0x20] sm:$0xf]
    %v65 = vld [vmem:[#allocation4 + $0x24] sm:$0xf]
    %v66 = vld [vmem:[#allocation4 + $0x28] sm:$0xf]
    %v67 = vld [vmem:[#allocation4 + $0x2c] sm:$0xf]
    %v68 = vld [vmem:[#allocation4 + $0x30] sm:$0xf]
    %v69 = vld [vmem:[#allocation4 + $0x34] sm:$0xf]
    %v70 = vld [vmem:[#allocation4 + $0x38] sm:$0xf]
    %v71 = vld [vmem:[#allocation4 + $0x3c] sm:$0xf]
    %v88 = vunpack.c.l.b16 %v40
    %v89 = vunpack.c.l.b16 %v41
    %v90 = vunpack.c.l.b16 %v42
    %v91 = vunpack.c.l.b16 %v43
    %v92 = vunpack.c.l.b16 %v44
    %v93 = vunpack.c.l.b16 %v45
    %v94 = vunpack.c.l.b16 %v46
    %v95 = vunpack.c.l.b16 %v47
    %v96 = vunpack.c.l.b16 %v48
    %v97 = vunpack.c.l.b16 %v49
    %v98 = vunpack.c.l.b16 %v50
    %v99 = vunpack.c.l.b16 %v51
    %v100 = vunpack.c.l.b16 %v52
    %v101 = vunpack.c.l.b16 %v53
    %v102 = vunpack.c.l.b16 %v54
    %v103 = vunpack.c.l.b16 %v55
    %v104 = vpack.c.b16 %v89, %v88
    %v105 = vpack.c.b16 %v91, %v90
    %v106 = vpack.c.b16 %v93, %v92
    %v107 = vpack.c.b16 %v95, %v94
    %v108 = vpack.c.b16 %v97, %v96
    %v109 = vpack.c.b16 %v99, %v98
    %v110 = vpack.c.b16 %v101, %v100
    %v111 = vpack.c.b16 %v103, %v102
    %v136 = vunpack.c.l.b16 %v56
    %v137 = vunpack.c.l.b16 %v57
    %v138 = vunpack.c.l.b16 %v58
    %v139 = vunpack.c.l.b16 %v59
    %v140 = vunpack.c.l.b16 %v60
    %v141 = vunpack.c.l.b16 %v61
    %v142 = vunpack.c.l.b16 %v62
    %v143 = vunpack.c.l.b16 %v63
    %v144 = vunpack.c.l.b16 %v64
    %v145 = vunpack.c.l.b16 %v65
    %v146 = vunpack.c.l.b16 %v66
    %v147 = vunpack.c.l.b16 %v67
    %v148 = vunpack.c.l.b16 %v68
    %v149 = vunpack.c.l.b16 %v69
    %v150 = vunpack.c.l.b16 %v70
    %v151 = vunpack.c.l.b16 %v71
    %v152 = vpack.c.b16 %v137, %v136
    %v153 = vpack.c.b16 %v139, %v138
    %v154 = vpack.c.b16 %v141, %v140
    %v155 = vpack.c.b16 %v143, %v142
    %v156 = vpack.c.b16 %v145, %v144
    %v157 = vpack.c.b16 %v147, %v146
    %v158 = vpack.c.b16 %v149, %v148
    %v159 = vpack.c.b16 %v151, %v150
    %168 = vmatprep.subr.bf16.mxu0 0
    %169 = vmatpush1.bf16.msra.mxu0 %v152
    %170 = vmatprep.subr.bf16.mxu0 0
    %171 = vmatpush1.bf16.msra.mxu0 %v153
    %172 = vmatprep.subr.bf16.mxu0 0
    %173 = vmatpush1.bf16.msra.mxu0 %v154
    %174 = vmatprep.subr.bf16.mxu0 0
    %175 = vmatpush1.bf16.msra.mxu0 %v155
    %176 = vmatprep.subr.bf16.mxu0 0
    %177 = vmatpush1.bf16.msra.mxu0 %v156
    %178 = vmatprep.subr.bf16.mxu0 0
    %179 = vmatpush1.bf16.msra.mxu0 %v157
    %180 = vmatprep.subr.bf16.mxu0 0
    %181 = vmatpush1.bf16.msra.mxu0 %v158
    %182 = vmatprep.subr.bf16.mxu0 0
    %183 = vmatpush1.bf16.msra.mxu0 %v159
    %184 = vmatprep.subr.bf16.mxu0 0
    %185 = vmatpush1.bf16.msra.mxu0 0
    %186 = vmatprep.subr.bf16.mxu0 0
    %187 = vmatpush1.bf16.msra.mxu0 0
    %188 = vmatprep.subr.bf16.mxu0 0
    %189 = vmatpush1.bf16.msra.mxu0 0
    %190 = vmatprep.subr.bf16.mxu0 0
    %191 = vmatpush1.bf16.msra.mxu0 0
    %192 = vmatprep.subr.bf16.mxu0 0
    %193 = vmatpush1.bf16.msra.mxu0 0
    %194 = vmatprep.subr.bf16.mxu0 0
    %195 = vmatpush1.bf16.msra.mxu0 0
    %196 = vmatprep.subr.bf16.mxu0 0
    %197 = vmatpush1.bf16.msra.mxu0 0
    %198 = vmatprep.subr.bf16.mxu0 0
    %199 = vmatpush1.bf16.msra.mxu0 0
    %200 = vmatprep.mubr.bf16.mxu0 0
    %201 = vmatmul.mubr.bf16.gmra.mrb[0].mxu0 %v104
    %v202 = vpop.f32.mrb[0].mxu0
    %v203 = vadd.f32 0.0, %v202
    %v204 = vpop.f32.mrb[0].mxu0
    %v205 = vpop.f32.mrb[0].mxu0
    %v206 = vadd.f32 0.0, %v205
    %v207 = vpop.f32.mrb[0].mxu0
    %208 = vmatprep.mubr.bf16.mxu0 0
    %209 = vmatmul.mubr.bf16.gmra.mrb[0].mxu0 %v105
    %v210 = vpop.f32.mrb[0].mxu0
    %v211 = vadd.f32 0.0, %v210
    %v212 = vpop.f32.mrb[0].mxu0
    %v213 = vpop.f32.mrb[0].mxu0
    %v214 = vadd.f32 0.0, %v213
    %v215 = vpop.f32.mrb[0].mxu0
    %216 = vmatprep.mubr.bf16.mxu0 0
    %217 = vmatmul.mubr.bf16.gmra.mrb[0].mxu0 %v106
    %v218 = vpop.f32.mrb[0].mxu0
    %v219 = vadd.f32 0.0, %v218
    %v220 = vpop.f32.mrb[0].mxu0
    %v221 = vpop.f32.mrb[0].mxu0
    %v222 = vadd.f32 0.0, %v221
    %v223 = vpop.f32.mrb[0].mxu0
    %224 = vmatprep.mubr.bf16.mxu0 0
    %225 = vmatmul.mubr.bf16.gmra.mrb[0].mxu0 %v107
    %v226 = vpop.f32.mrb[0].mxu0
    %v227 = vadd.f32 0.0, %v226
    %v228 = vpop.f32.mrb[0].mxu0
    %v229 = vpop.f32.mrb[0].mxu0
    %v230 = vadd.f32 0.0, %v229
    %v231 = vpop.f32.mrb[0].mxu0
    %232 = vmatprep.mubr.bf16.mxu0 0
    %233 = vmatmul.mubr.bf16.gmra.mrb[0].mxu0 %v108
    %v234 = vpop.f32.mrb[0].mxu0
    %v235 = vadd.f32 0.0, %v234
    %v236 = vpop.f32.mrb[0].mxu0
    %v237 = vpop.f32.mrb[0].mxu0
    %v238 = vadd.f32 0.0, %v237
    %v239 = vpop.f32.mrb[0].mxu0
    %240 = vmatprep.mubr.bf16.mxu0 0
    %241 = vmatmul.mubr.bf16.gmra.mrb[0].mxu0 %v109
    %v242 = vpop.f32.mrb[0].mxu0
    %v243 = vadd.f32 0.0, %v242
    %v244 = vpop.f32.mrb[0].mxu0
    %v245 = vpop.f32.mrb[0].mxu0
    %v246 = vadd.f32 0.0, %v245
    %v247 = vpop.f32.mrb[0].mxu0
    %248 = vmatprep.mubr.bf16.mxu0 0
    %249 = vmatmul.mubr.bf16.gmra.mrb[0].mxu0 %v110
    %v250 = vpop.f32.mrb[0].mxu0
    %v251 = vadd.f32 0.0, %v250
    %v252 = vpop.f32.mrb[0].mxu0
    %v253 = vpop.f32.mrb[0].mxu0
    %v254 = vadd.f32 0.0, %v253
    %v255 = vpop.f32.mrb[0].mxu0
    %256 = vmatprep.mubr.bf16.mxu0 0
    %257 = vmatmul.mubr.bf16.gmra.mrb[0].mxu0 %v111
    %v258 = vpop.f32.mrb[0].mxu0
    %v259 = vadd.f32 0.0, %v258
    %v260 = vpop.f32.mrb[0].mxu0
    %v261 = vpop.f32.mrb[0].mxu0
    %v262 = vadd.f32 0.0, %v261
    %v263 = vpop.f32.mrb[0].mxu0
    %264 = vdwg.mxu0
    %v265 = vpack.c.bf16 %v206, %v203
    %v266 = vpack.c.bf16 %v214, %v211
    %v267 = vpack.c.bf16 %v222, %v219
    %v268 = vpack.c.bf16 %v230, %v227
    %v269 = vpack.c.bf16 %v238, %v235
    %v270 = vpack.c.bf16 %v246, %v243
    %v271 = vpack.c.bf16 %v254, %v251
    %v272 = vpack.c.bf16 %v262, %v259
    %v281 = vunpack.c.l.b16 %v265
    %v282 = vunpack.c.h.b16 %v265
    %v283 = vunpack.c.l.b16 %v266
    %v284 = vunpack.c.h.b16 %v266
    %v285 = vunpack.c.l.b16 %v267
    %v286 = vunpack.c.h.b16 %v267
    %v287 = vunpack.c.l.b16 %v268
    %v288 = vunpack.c.h.b16 %v268
    %v289 = vunpack.c.l.b16 %v269
    %v290 = vunpack.c.h.b16 %v269
    %v291 = vunpack.c.l.b16 %v270
    %v292 = vunpack.c.h.b16 %v270
    %v293 = vunpack.c.l.b16 %v271
    %v294 = vunpack.c.h.b16 %v271
    %v295 = vunpack.c.l.b16 %v272
    %v296 = vunpack.c.h.b16 %v272
    %v297 = vpack.c.b16 %v281, %v281
    %v298 = vpack.c.b16 %v282, %v282
    %v299 = vpack.c.b16 %v283, %v283
    %v300 = vpack.c.b16 %v284, %v284
    %v301 = vpack.c.b16 %v285, %v285
    %v302 = vpack.c.b16 %v286, %v286
    %v303 = vpack.c.b16 %v287, %v287
    %v304 = vpack.c.b16 %v288, %v288
    %v305 = vpack.c.b16 %v289, %v289
    %v306 = vpack.c.b16 %v290, %v290
    %v307 = vpack.c.b16 %v291, %v291
    %v308 = vpack.c.b16 %v292, %v292
    %v309 = vpack.c.b16 %v293, %v293
    %v310 = vpack.c.b16 %v294, %v294
    %v311 = vpack.c.b16 %v295, %v295
    %v312 = vpack.c.b16 %v296, %v296
    %329 = vst [vmem:[%s2] sm:$0xf] %v297
    %330 = vst [vmem:[%s2 + $0x4] sm:$0xf] %v298
    %331 = vst [vmem:[%s2 + $0x8] sm:$0xf] %v299
    %332 = vst [vmem:[%s2 + $0xc] sm:$0xf] %v300
    %333 = vst [vmem:[%s2 + $0x10] sm:$0xf] %v301
    %334 = vst [vmem:[%s2 + $0x14] sm:$0xf] %v302
    %335 = vst [vmem:[%s2 + $0x18] sm:$0xf] %v303
    %336 = vst [vmem:[%s2 + $0x1c] sm:$0xf] %v304
    %337 = vst [vmem:[%s2 + $0x20] sm:$0xf] %v305
    %338 = vst [vmem:[%s2 + $0x24] sm:$0xf] %v306
    %339 = vst [vmem:[%s2 + $0x28] sm:$0xf] %v307
    %340 = vst [vmem:[%s2 + $0x2c] sm:$0xf] %v308
    %341 = vst [vmem:[%s2 + $0x30] sm:$0xf] %v309
    %342 = vst [vmem:[%s2 + $0x34] sm:$0xf] %v310
    %343 = vst [vmem:[%s2 + $0x38] sm:$0xf] %v311
    %344 = vst [vmem:[%s2 + $0x3c] sm:$0xf] %v312
    // Predicated region
    $region18: #{graph_feature_extractor.6} parent=1 // pred_check
      _
    $region19: #{graph_feature_extractor.6} parent=1 // pred_check_branch
      %346 = sbr.rel (0) target = $region21
    $region20: #{graph_feature_extractor.6} parent=1 // pred_region
      _
    $region21: #{graph_feature_extractor.6} parent=1 // pred_fallthru
      _
    // Predicated region
    $region22: #{graph_feature_extractor.6} parent=1 // pred_check
      _
    $region23: #{graph_feature_extractor.6} parent=1 // pred_check_branch
      %348 = sbr.rel (0) target = $region25
    $region24: #{graph_feature_extractor.6} parent=1 // pred_region
      _
    $region25: #{graph_feature_extractor.6} parent=1 // pred_fallthru
      _
    %349 = vsyncpa [#allocation3], 1
    %350 = vsyncpa [#allocation5], 1

// kernel: graph_feature_extractor.7
$region0: #{graph_feature_extractor.7}
  #allocation0 [shape = 'u32[]', space=smem, size = 0x4, offset = 0x4, fixed_abs, tag = 'smem constant byte address 0x4 - core index']
  #allocation1 [shape = 'u32[144,128]{1,0:T(1,128)}', space=vmem, size = 0x12000, scoped, tag = 'internal scratch']
  %s0 = inlined_call_operand.vmem [shape: bf16[128,128], index: 0, kind: input, shape index: {}]
  %s1 = inlined_call_operand.vmem [shape: bf16[128,384], index: 1, kind: input, shape index: {}]
  %s2 = inlined_call_operand.vmem [shape: bf16[128,384], index: 2, kind: output, shape index: {}]
  %s3 = sld [smem:[#allocation0]]
  $region18: #{graph_feature_extractor.7} parent=0
    _
  %s5 = ssub.s32 1, %s3
  %s6 = scalar_select 0, %s5, %s3
  // Predicated region
  $region2: #{graph_feature_extractor.7} parent=0 // pred_check
    _
  $region3: #{graph_feature_extractor.7} parent=0 // pred_check_branch
    %8 = sbr.rel (0) target = $region5
  $region4: #{graph_feature_extractor.7} parent=0 // pred_region
    _
  $region5: #{graph_feature_extractor.7} parent=0 // pred_fallthru
    _
  // Predicated region
  $region6: #{graph_feature_extractor.7} parent=0 // pred_check
    _
  $region7: #{graph_feature_extractor.7} parent=0 // pred_check_branch
    %10 = sbr.rel (0) target = $region9
  $region8: #{graph_feature_extractor.7} parent=0 // pred_region
    _
  $region9: #{graph_feature_extractor.7} parent=0 // pred_fallthru
    _
  %v12 = vld [vmem:[%s0] sm:$0xf]
  %v13 = vld [vmem:[%s0 + $0x4] sm:$0xf]
  %v14 = vld [vmem:[%s0 + $0x8] sm:$0xf]
  %v15 = vld [vmem:[%s0 + $0xc] sm:$0xf]
  %v16 = vld [vmem:[%s0 + $0x10] sm:$0xf]
  %v17 = vld [vmem:[%s0 + $0x14] sm:$0xf]
  %v18 = vld [vmem:[%s0 + $0x18] sm:$0xf]
  %v19 = vld [vmem:[%s0 + $0x1c] sm:$0xf]
  %v20 = vld [vmem:[%s0 + $0x20] sm:$0xf]
  %v21 = vld [vmem:[%s0 + $0x24] sm:$0xf]
  %v22 = vld [vmem:[%s0 + $0x28] sm:$0xf]
  %v23 = vld [vmem:[%s0 + $0x2c] sm:$0xf]
  %v24 = vld [vmem:[%s0 + $0x30] sm:$0xf]
  %v25 = vld [vmem:[%s0 + $0x34] sm:$0xf]
  %v26 = vld [vmem:[%s0 + $0x38] sm:$0xf]
  %v27 = vld [vmem:[%s0 + $0x3c] sm:$0xf]
  %v28 = vld [vmem:[%s1] sm:$0xff]
  %v29 = vld [vmem:[%s1 + $0x8] sm:$0xf]
  %v30 = vld [vmem:[%s1 + $0xc] sm:$0xff]
  %v31 = vld [vmem:[%s1 + $0x14] sm:$0xf]
  %v32 = vld [vmem:[%s1 + $0x18] sm:$0xff]
  %v33 = vld [vmem:[%s1 + $0x20] sm:$0xf]
  %v34 = vld [vmem:[%s1 + $0x24] sm:$0xff]
  %v35 = vld [vmem:[%s1 + $0x2c] sm:$0xf]
  %v36 = vld [vmem:[%s1 + $0x30] sm:$0xff]
  %v37 = vld [vmem:[%s1 + $0x38] sm:$0xf]
  %v38 = vld [vmem:[%s1 + $0x3c] sm:$0xff]
  %v39 = vld [vmem:[%s1 + $0x44] sm:$0xf]
  %v40 = vld [vmem:[%s1 + $0x48] sm:$0xff]
  %v41 = vld [vmem:[%s1 + $0x50] sm:$0xf]
  %v42 = vld [vmem:[%s1 + $0x54] sm:$0xff]
  %v43 = vld [vmem:[%s1 + $0x5c] sm:$0xf]
  %v44 = vld [vmem:[%s1 + $0x60] sm:$0xff]
  %v45 = vld [vmem:[%s1 + $0x68] sm:$0xf]
  %v46 = vld [vmem:[%s1 + $0x6c] sm:$0xff]
  %v47 = vld [vmem:[%s1 + $0x74] sm:$0xf]
  %v48 = vld [vmem:[%s1 + $0x78] sm:$0xff]
  %v49 = vld [vmem:[%s1 + $0x80] sm:$0xf]
  %v50 = vld [vmem:[%s1 + $0x84] sm:$0xff]
  %v51 = vld [vmem:[%s1 + $0x8c] sm:$0xf]
  %v52 = vld [vmem:[%s1 + $0x90] sm:$0xff]
  %v53 = vld [vmem:[%s1 + $0x98] sm:$0xf]
  %v54 = vld [vmem:[%s1 + $0x9c] sm:$0xff]
  %v55 = vld [vmem:[%s1 + $0xa4] sm:$0xf]
  %v56 = vld [vmem:[%s1 + $0xa8] sm:$0xff]
  %v57 = vld [vmem:[%s1 + $0xb0] sm:$0xf]
  %v58 = vld [vmem:[%s1 + $0xb4] sm:$0xff]
  %v59 = vld [vmem:[%s1 + $0xbc] sm:$0xf]
  %v76 = vunpack.c.l.b16 %v12
  %v77 = vunpack.c.l.b16 %v13
  %v78 = vunpack.c.l.b16 %v14
  %v79 = vunpack.c.l.b16 %v15
  %v80 = vunpack.c.l.b16 %v16
  %v81 = vunpack.c.l.b16 %v17
  %v82 = vunpack.c.l.b16 %v18
  %v83 = vunpack.c.l.b16 %v19
  %v84 = vunpack.c.l.b16 %v20
  %v85 = vunpack.c.l.b16 %v21
  %v86 = vunpack.c.l.b16 %v22
  %v87 = vunpack.c.l.b16 %v23
  %v88 = vunpack.c.l.b16 %v24
  %v89 = vunpack.c.l.b16 %v25
  %v90 = vunpack.c.l.b16 %v26
  %v91 = vunpack.c.l.b16 %v27
  %v92 = vpack.c.b16 %v77, %v76
  %v93 = vpack.c.b16 %v79, %v78
  %v94 = vpack.c.b16 %v81, %v80
  %v95 = vpack.c.b16 %v83, %v82
  %v96 = vpack.c.b16 %v85, %v84
  %v97 = vpack.c.b16 %v87, %v86
  %v98 = vpack.c.b16 %v89, %v88
  %v99 = vpack.c.b16 %v91, %v90
  %v140 = vunpack.c.l.b16 %v28
  %v141 = vunpack.c.h.b16 %v28
  %v142 = vunpack.c.l.b16 %v29
  %v143 = vunpack.c.l.b16 %v30
  %v144 = vunpack.c.h.b16 %v30
  %v145 = vunpack.c.l.b16 %v31
  %v146 = vunpack.c.l.b16 %v32
  %v147 = vunpack.c.h.b16 %v32
  %v148 = vunpack.c.l.b16 %v33
  %v149 = vunpack.c.l.b16 %v34
  %v150 = vunpack.c.h.b16 %v34
  %v151 = vunpack.c.l.b16 %v35
  %v152 = vunpack.c.l.b16 %v36
  %v153 = vunpack.c.h.b16 %v36
  %v154 = vunpack.c.l.b16 %v37
  %v155 = vunpack.c.l.b16 %v38
  %v156 = vunpack.c.h.b16 %v38
  %v157 = vunpack.c.l.b16 %v39
  %v158 = vunpack.c.l.b16 %v40
  %v159 = vunpack.c.h.b16 %v40
  %v160 = vunpack.c.l.b16 %v41
  %v161 = vunpack.c.l.b16 %v42
  %v162 = vunpack.c.h.b16 %v42
  %v163 = vunpack.c.l.b16 %v43
  %v164 = vunpack.c.l.b16 %v44
  %v165 = vunpack.c.h.b16 %v44
  %v166 = vunpack.c.l.b16 %v45
  %v167 = vunpack.c.l.b16 %v46
  %v168 = vunpack.c.h.b16 %v46
  %v169 = vunpack.c.l.b16 %v47
  %v170 = vunpack.c.l.b16 %v48
  %v171 = vunpack.c.h.b16 %v48
  %v172 = vunpack.c.l.b16 %v49
  %v173 = vunpack.c.l.b16 %v50
  %v174 = vunpack.c.h.b16 %v50
  %v175 = vunpack.c.l.b16 %v51
  %v176 = vunpack.c.l.b16 %v52
  %v177 = vunpack.c.h.b16 %v52
  %v178 = vunpack.c.l.b16 %v53
  %v179 = vunpack.c.l.b16 %v54
  %v180 = vunpack.c.h.b16 %v54
  %v181 = vunpack.c.l.b16 %v55
  %v182 = vunpack.c.l.b16 %v56
  %v183 = vunpack.c.h.b16 %v56
  %v184 = vunpack.c.l.b16 %v57
  %v185 = vunpack.c.l.b16 %v58
  %v186 = vunpack.c.h.b16 %v58
  %v187 = vunpack.c.l.b16 %v59
  %v188 = vpack.c.b16 %v143, %v140
  %v189 = vpack.c.b16 %v144, %v141
  %v190 = vpack.c.b16 %v145, %v142
  %v191 = vpack.c.b16 %v149, %v146
  %v192 = vpack.c.b16 %v150, %v147
  %v193 = vpack.c.b16 %v151, %v148
  %v194 = vpack.c.b16 %v155, %v152
  %v195 = vpack.c.b16 %v156, %v153
  %v196 = vpack.c.b16 %v157, %v154
  %v197 = vpack.c.b16 %v161, %v158
  %v198 = vpack.c.b16 %v162, %v159
  %v199 = vpack.c.b16 %v163, %v160
  %v200 = vpack.c.b16 %v167, %v164
  %v201 = vpack.c.b16 %v168, %v165
  %v202 = vpack.c.b16 %v169, %v166
  %v203 = vpack.c.b16 %v173, %v170
  %v204 = vpack.c.b16 %v174, %v171
  %v205 = vpack.c.b16 %v175, %v172
  %v206 = vpack.c.b16 %v179, %v176
  %v207 = vpack.c.b16 %v180, %v177
  %v208 = vpack.c.b16 %v181, %v178
  %v209 = vpack.c.b16 %v185, %v182
  %v210 = vpack.c.b16 %v186, %v183
  %v211 = vpack.c.b16 %v187, %v184
  %236 = vmatprep.subr.bf16.mxu0 %v189
  %237 = vmatpush1.bf16.msra.mxu0 %v188
  %238 = vmatprep.subr.bf16.mxu0 %v192
  %239 = vmatpush1.bf16.msra.mxu0 %v191
  %240 = vmatprep.subr.bf16.mxu0 %v195
  %241 = vmatpush1.bf16.msra.mxu0 %v194
  %242 = vmatprep.subr.bf16.mxu0 %v198
  %243 = vmatpush1.bf16.msra.mxu0 %v197
  %244 = vmatprep.subr.bf16.mxu0 %v201
  %245 = vmatpush1.bf16.msra.mxu0 %v200
  %246 = vmatprep.subr.bf16.mxu0 %v204
  %247 = vmatpush1.bf16.msra.mxu0 %v203
  %248 = vmatprep.subr.bf16.mxu0 %v207
  %249 = vmatpush1.bf16.msra.mxu0 %v206
  %250 = vmatprep.subr.bf16.mxu0 %v210
  %251 = vmatpush1.bf16.msra.mxu0 %v209
  %252 = vmatprep.subr.bf16.mxu0 0
  %253 = vmatpush1.bf16.msra.mxu0 0
  %254 = vmatprep.subr.bf16.mxu0 0
  %255 = vmatpush1.bf16.msra.mxu0 0
  %256 = vmatprep.subr.bf16.mxu0 0
  %257 = vmatpush1.bf16.msra.mxu0 0
  %258 = vmatprep.subr.bf16.mxu0 0
  %259 = vmatpush1.bf16.msra.mxu0 0
  %260 = vmatprep.subr.bf16.mxu0 0
  %261 = vmatpush1.bf16.msra.mxu0 0
  %262 = vmatprep.subr.bf16.mxu0 0
  %263 = vmatpush1.bf16.msra.mxu0 0
  %264 = vmatprep.subr.bf16.mxu0 0
  %265 = vmatpush1.bf16.msra.mxu0 0
  %266 = vmatprep.subr.bf16.mxu0 0
  %267 = vmatpush1.bf16.msra.mxu0 0
  %268 = vmatprep.mubr.bf16.mxu0 0
  %269 = vmatmul.mubr.bf16.gmra.mrb[0].mxu0 %v92
  %v270 = vpop.f32.mrb[0].mxu0
  %v271 = vadd.f32 0.0, %v270
  %v272 = vpop.f32.mrb[0].mxu0
  %v273 = vadd.f32 0.0, %v272
  %v274 = vpop.f32.mrb[0].mxu0
  %v275 = vadd.f32 0.0, %v274
  %v276 = vpop.f32.mrb[0].mxu0
  %v277 = vadd.f32 0.0, %v276
  %278 = vmatprep.mubr.bf16.mxu0 0
  %279 = vmatmul.mubr.bf16.gmra.mrb[0].mxu0 %v93
  %v280 = vpop.f32.mrb[0].mxu0
  %v281 = vadd.f32 0.0, %v280
  %v282 = vpop.f32.mrb[0].mxu0
  %v283 = vadd.f32 0.0, %v282
  %v284 = vpop.f32.mrb[0].mxu0
  %v285 = vadd.f32 0.0, %v284
  %v286 = vpop.f32.mrb[0].mxu0
  %v287 = vadd.f32 0.0, %v286
  %288 = vmatprep.mubr.bf16.mxu0 0
  %289 = vmatmul.mubr.bf16.gmra.mrb[0].mxu0 %v94
  %v290 = vpop.f32.mrb[0].mxu0
  %v291 = vadd.f32 0.0, %v290
  %v292 = vpop.f32.mrb[0].mxu0
  %v293 = vadd.f32 0.0, %v292
  %v294 = vpop.f32.mrb[0].mxu0
  %v295 = vadd.f32 0.0, %v294
  %v296 = vpop.f32.mrb[0].mxu0
  %v297 = vadd.f32 0.0, %v296
  %298 = vmatprep.mubr.bf16.mxu0 0
  %299 = vmatmul.mubr.bf16.gmra.mrb[0].mxu0 %v95
  %v300 = vpop.f32.mrb[0].mxu0
  %v301 = vadd.f32 0.0, %v300
  %v302 = vpop.f32.mrb[0].mxu0
  %v303 = vadd.f32 0.0, %v302
  %v304 = vpop.f32.mrb[0].mxu0
  %v305 = vadd.f32 0.0, %v304
  %v306 = vpop.f32.mrb[0].mxu0
  %v307 = vadd.f32 0.0, %v306
  %308 = vmatprep.mubr.bf16.mxu0 0
  %309 = vmatmul.mubr.bf16.gmra.mrb[0].mxu0 %v96
  %v310 = vpop.f32.mrb[0].mxu0
  %v311 = vadd.f32 0.0, %v310
  %v312 = vpop.f32.mrb[0].mxu0
  %v313 = vadd.f32 0.0, %v312
  %v314 = vpop.f32.mrb[0].mxu0
  %v315 = vadd.f32 0.0, %v314
  %v316 = vpop.f32.mrb[0].mxu0
  %v317 = vadd.f32 0.0, %v316
  %318 = vmatprep.mubr.bf16.mxu0 0
  %319 = vmatmul.mubr.bf16.gmra.mrb[0].mxu0 %v97
  %v320 = vpop.f32.mrb[0].mxu0
  %v321 = vadd.f32 0.0, %v320
  %v322 = vpop.f32.mrb[0].mxu0
  %v323 = vadd.f32 0.0, %v322
  %v324 = vpop.f32.mrb[0].mxu0
  %v325 = vadd.f32 0.0, %v324
  %v326 = vpop.f32.mrb[0].mxu0
  %v327 = vadd.f32 0.0, %v326
  %328 = vmatprep.mubr.bf16.mxu0 0
  %329 = vmatmul.mubr.bf16.gmra.mrb[0].mxu0 %v98
  %v330 = vpop.f32.mrb[0].mxu0
  %v331 = vadd.f32 0.0, %v330
  %v332 = vpop.f32.mrb[0].mxu0
  %v333 = vadd.f32 0.0, %v332
  %v334 = vpop.f32.mrb[0].mxu0
  %v335 = vadd.f32 0.0, %v334
  %v336 = vpop.f32.mrb[0].mxu0
  %v337 = vadd.f32 0.0, %v336
  %338 = vmatprep.mubr.bf16.mxu0 0
  %339 = vmatmul.mubr.bf16.gmra.mrb[0].mxu0 %v99
  %v340 = vpop.f32.mrb[0].mxu0
  %v341 = vadd.f32 0.0, %v340
  %v342 = vpop.f32.mrb[0].mxu0
  %v343 = vadd.f32 0.0, %v342
  %v344 = vpop.f32.mrb[0].mxu0
  %v345 = vadd.f32 0.0, %v344
  %v346 = vpop.f32.mrb[0].mxu0
  %v347 = vadd.f32 0.0, %v346
  %348 = vdwg.mxu0
  %349 = vmatprep.subr.bf16.mxu0 0
  %350 = vmatpush1.bf16.msra.mxu0 %v190
  %351 = vmatprep.subr.bf16.mxu0 0
  %352 = vmatpush1.bf16.msra.mxu0 %v193
  %353 = vmatprep.subr.bf16.mxu0 0
  %354 = vmatpush1.bf16.msra.mxu0 %v196
  %355 = vmatprep.subr.bf16.mxu0 0
  %356 = vmatpush1.bf16.msra.mxu0 %v199
  %357 = vmatprep.subr.bf16.mxu0 0
  %358 = vmatpush1.bf16.msra.mxu0 %v202
  %359 = vmatprep.subr.bf16.mxu0 0
  %360 = vmatpush1.bf16.msra.mxu0 %v205
  %361 = vmatprep.subr.bf16.mxu0 0
  %362 = vmatpush1.bf16.msra.mxu0 %v208
  %363 = vmatprep.subr.bf16.mxu0 0
  %364 = vmatpush1.bf16.msra.mxu0 %v211
  %365 = vmatprep.subr.bf16.mxu0 0
  %366 = vmatpush1.bf16.msra.mxu0 0
  %367 = vmatprep.subr.bf16.mxu0 0
  %368 = vmatpush1.bf16.msra.mxu0 0
  %369 = vmatprep.subr.bf16.mxu0 0
  %370 = vmatpush1.bf16.msra.mxu0 0
  %371 = vmatprep.subr.bf16.mxu0 0
  %372 = vmatpush1.bf16.msra.mxu0 0
  %373 = vmatprep.subr.bf16.mxu0 0
  %374 = vmatpush1.bf16.msra.mxu0 0
  %375 = vmatprep.subr.bf16.mxu0 0
  %376 = vmatpush1.bf16.msra.mxu0 0
  %377 = vmatprep.subr.bf16.mxu0 0
  %378 = vmatpush1.bf16.msra.mxu0 0
  %379 = vmatprep.subr.bf16.mxu0 0
  %380 = vmatpush1.bf16.msra.mxu0 0
  %381 = vmatprep.mubr.bf16.mxu0 0
  %382 = vmatmul.mubr.bf16.gmra.mrb[0].mxu0 %v92
  %v383 = vpop.f32.mrb[0].mxu0
  %v384 = vadd.f32 0.0, %v383
  %v385 = vpop.f32.mrb[0].mxu0
  %v386 = vpop.f32.mrb[0].mxu0
  %v387 = vadd.f32 0.0, %v386
  %v388 = vpop.f32.mrb[0].mxu0
  %389 = vmatprep.mubr.bf16.mxu0 0
  %390 = vmatmul.mubr.bf16.gmra.mrb[0].mxu0 %v93
  %v391 = vpop.f32.mrb[0].mxu0
  %v392 = vadd.f32 0.0, %v391
  %v393 = vpop.f32.mrb[0].mxu0
  %v394 = vpop.f32.mrb[0].mxu0
  %v395 = vadd.f32 0.0, %v394
  %v396 = vpop.f32.mrb[0].mxu0
  %397 = vmatprep.mubr.bf16.mxu0 0
  %398 = vmatmul.mubr.bf16.gmra.mrb[0].mxu0 %v94
  %v399 = vpop.f32.mrb[0].mxu0
  %v400 = vadd.f32 0.0, %v399
  %v401 = vpop.f32.mrb[0].mxu0
  %v402 = vpop.f32.mrb[0].mxu0
  %v403 = vadd.f32 0.0, %v402
  %v404 = vpop.f32.mrb[0].mxu0
  %405 = vmatprep.mubr.bf16.mxu0 0
  %406 = vmatmul.mubr.bf16.gmra.mrb[0].mxu0 %v95
  %v407 = vpop.f32.mrb[0].mxu0
  %v408 = vadd.f32 0.0, %v407
  %v409 = vpop.f32.mrb[0].mxu0
  %v410 = vpop.f32.mrb[0].mxu0
  %v411 = vadd.f32 0.0, %v410
  %v412 = vpop.f32.mrb[0].mxu0
  %413 = vmatprep.mubr.bf16.mxu0 0
  %414 = vmatmul.mubr.bf16.gmra.mrb[0].mxu0 %v96
  %v415 = vpop.f32.mrb[0].mxu0
  %v416 = vadd.f32 0.0, %v415
  %v417 = vpop.f32.mrb[0].mxu0
  %v418 = vpop.f32.mrb[0].mxu0
  %v419 = vadd.f32 0.0, %v418
  %v420 = vpop.f32.mrb[0].mxu0
  %421 = vmatprep.mubr.bf16.mxu0 0
  %422 = vmatmul.mubr.bf16.gmra.mrb[0].mxu0 %v97
  %v423 = vpop.f32.mrb[0].mxu0
  %v424 = vadd.f32 0.0, %v423
  %v425 = vpop.f32.mrb[0].mxu0
  %v426 = vpop.f32.mrb[0].mxu0
  %v427 = vadd.f32 0.0, %v426
  %v428 = vpop.f32.mrb[0].mxu0
  %429 = vmatprep.mubr.bf16.mxu0 0
  %430 = vmatmul.mubr.bf16.gmra.mrb[0].mxu0 %v98
  %v431 = vpop.f32.mrb[0].mxu0
  %v432 = vadd.f32 0.0, %v431
  %v433 = vpop.f32.mrb[0].mxu0
  %v434 = vpop.f32.mrb[0].mxu0
  %v435 = vadd.f32 0.0, %v434
  %v436 = vpop.f32.mrb[0].mxu0
  %437 = vmatprep.mubr.bf16.mxu0 0
  %438 = vmatmul.mubr.bf16.gmra.mrb[0].mxu0 %v99
  %v439 = vpop.f32.mrb[0].mxu0
  %v440 = vadd.f32 0.0, %v439
  %v441 = vpop.f32.mrb[0].mxu0
  %v442 = vpop.f32.mrb[0].mxu0
  %v443 = vadd.f32 0.0, %v442
  %v444 = vpop.f32.mrb[0].mxu0
  %445 = vdwg.mxu0
  %v446 = vpack.c.bf16 %v275, %v271
  %v447 = vpack.c.bf16 %v277, %v273
  %v448 = vpack.c.bf16 %v387, %v384
  %v449 = vpack.c.bf16 %v285, %v281
  %v450 = vpack.c.bf16 %v287, %v283
  %v451 = vpack.c.bf16 %v395, %v392
  %v452 = vpack.c.bf16 %v295, %v291
  %v453 = vpack.c.bf16 %v297, %v293
  %v454 = vpack.c.bf16 %v403, %v400
  %v455 = vpack.c.bf16 %v305, %v301
  %v456 = vpack.c.bf16 %v307, %v303
  %v457 = vpack.c.bf16 %v411, %v408
  %v458 = vpack.c.bf16 %v315, %v311
  %v459 = vpack.c.bf16 %v317, %v313
  %v460 = vpack.c.bf16 %v419, %v416
  %v461 = vpack.c.bf16 %v325, %v321
  %v462 = vpack.c.bf16 %v327, %v323
  %v463 = vpack.c.bf16 %v427, %v424
  %v464 = vpack.c.bf16 %v335, %v331
  %v465 = vpack.c.bf16 %v337, %v333
  %v466 = vpack.c.bf16 %v435, %v432
  %v467 = vpack.c.bf16 %v345, %v341
  %v468 = vpack.c.bf16 %v347, %v343
  %v469 = vpack.c.bf16 %v443, %v440
  %v494 = vunpack.c.l.b16 %v446
  %v495 = vunpack.c.l.b16 %v447
  %v496 = vunpack.c.l.b16 %v448
  %v497 = vunpack.c.h.b16 %v446
  %v498 = vunpack.c.h.b16 %v447
  %v499 = vunpack.c.h.b16 %v448
  %v500 = vunpack.c.l.b16 %v449
  %v501 = vunpack.c.l.b16 %v450
  %v502 = vunpack.c.l.b16 %v451
  %v503 = vunpack.c.h.b16 %v449
  %v504 = vunpack.c.h.b16 %v450
  %v505 = vunpack.c.h.b16 %v451
  %v506 = vunpack.c.l.b16 %v452
  %v507 = vunpack.c.l.b16 %v453
  %v508 = vunpack.c.l.b16 %v454
  %v509 = vunpack.c.h.b16 %v452
  %v510 = vunpack.c.h.b16 %v453
  %v511 = vunpack.c.h.b16 %v454
  %v512 = vunpack.c.l.b16 %v455
  %v513 = vunpack.c.l.b16 %v456
  %v514 = vunpack.c.l.b16 %v457
  %v515 = vunpack.c.h.b16 %v455
  %v516 = vunpack.c.h.b16 %v456
  %v517 = vunpack.c.h.b16 %v457
  %v518 = vunpack.c.l.b16 %v458
  %v519 = vunpack.c.l.b16 %v459
  %v520 = vunpack.c.l.b16 %v460
  %v521 = vunpack.c.h.b16 %v458
  %v522 = vunpack.c.h.b16 %v459
  %v523 = vunpack.c.h.b16 %v460
  %v524 = vunpack.c.l.b16 %v461
  %v525 = vunpack.c.l.b16 %v462
  %v526 = vunpack.c.l.b16 %v463
  %v527 = vunpack.c.h.b16 %v461
  %v528 = vunpack.c.h.b16 %v462
  %v529 = vunpack.c.h.b16 %v463
  %v530 = vunpack.c.l.b16 %v464
  %v531 = vunpack.c.l.b16 %v465
  %v532 = vunpack.c.l.b16 %v466
  %v533 = vunpack.c.h.b16 %v464
  %v534 = vunpack.c.h.b16 %v465
  %v535 = vunpack.c.h.b16 %v466
  %v536 = vunpack.c.l.b16 %v467
  %v537 = vunpack.c.l.b16 %v468
  %v538 = vunpack.c.l.b16 %v469
  %v539 = vunpack.c.h.b16 %v467
  %v540 = vunpack.c.h.b16 %v468
  %v541 = vunpack.c.h.b16 %v469
  %v542 = vpack.c.b16 %v495, %v494
  %v543 = vpack.c.b16 %v496, %v496
  %v544 = vpack.c.b16 %v498, %v497
  %v545 = vpack.c.b16 %v499, %v499
  %v546 = vpack.c.b16 %v501, %v500
  %v547 = vpack.c.b16 %v502, %v502
  %v548 = vpack.c.b16 %v504, %v503
  %v549 = vpack.c.b16 %v505, %v505
  %v550 = vpack.c.b16 %v507, %v506
  %v551 = vpack.c.b16 %v508, %v508
  %v552 = vpack.c.b16 %v510, %v509
  %v553 = vpack.c.b16 %v511, %v511
  %v554 = vpack.c.b16 %v513, %v512
  %v555 = vpack.c.b16 %v514, %v514
  %v556 = vpack.c.b16 %v516, %v515
  %v557 = vpack.c.b16 %v517, %v517
  %v558 = vpack.c.b16 %v519, %v518
  %v559 = vpack.c.b16 %v520, %v520
  %v560 = vpack.c.b16 %v522, %v521
  %v561 = vpack.c.b16 %v523, %v523
  %v562 = vpack.c.b16 %v525, %v524
  %v563 = vpack.c.b16 %v526, %v526
  %v564 = vpack.c.b16 %v528, %v527
  %v565 = vpack.c.b16 %v529, %v529
  %v566 = vpack.c.b16 %v531, %v530
  %v567 = vpack.c.b16 %v532, %v532
  %v568 = vpack.c.b16 %v534, %v533
  %v569 = vpack.c.b16 %v535, %v535
  %v570 = vpack.c.b16 %v537, %v536
  %v571 = vpack.c.b16 %v538, %v538
  %v572 = vpack.c.b16 %v540, %v539
  %v573 = vpack.c.b16 %v541, %v541
  %606 = vst [vmem:[%s2] sm:$0xff] %v542
  %607 = vst [vmem:[%s2 + $0x8] sm:$0xf] %v543
  %608 = vst [vmem:[%s2 + $0xc] sm:$0xff] %v544
  %609 = vst [vmem:[%s2 + $0x14] sm:$0xf] %v545
  %610 = vst [vmem:[%s2 + $0x18] sm:$0xff] %v546
  %611 = vst [vmem:[%s2 + $0x20] sm:$0xf] %v547
  %612 = vst [vmem:[%s2 + $0x24] sm:$0xff] %v548
  %613 = vst [vmem:[%s2 + $0x2c] sm:$0xf] %v549
  %614 = vst [vmem:[%s2 + $0x30] sm:$0xff] %v550
  %615 = vst [vmem:[%s2 + $0x38] sm:$0xf] %v551
  %616 = vst [vmem:[%s2 + $0x3c] sm:$0xff] %v552
  %617 = vst [vmem:[%s2 + $0x44] sm:$0xf] %v553
  %618 = vst [vmem:[%s2 + $0x48] sm:$0xff] %v554
  %619 = vst [vmem:[%s2 + $0x50] sm:$0xf] %v555
  %620 = vst [vmem:[%s2 + $0x54] sm:$0xff] %v556
  %621 = vst [vmem:[%s2 + $0x5c] sm:$0xf] %v557
  %622 = vst [vmem:[%s2 + $0x60] sm:$0xff] %v558
  %623 = vst [vmem:[%s2 + $0x68] sm:$0xf] %v559
  %624 = vst [vmem:[%s2 + $0x6c] sm:$0xff] %v560
  %625 = vst [vmem:[%s2 + $0x74] sm:$0xf] %v561
  %626 = vst [vmem:[%s2 + $0x78] sm:$0xff] %v562
  %627 = vst [vmem:[%s2 + $0x80] sm:$0xf] %v563
  %628 = vst [vmem:[%s2 + $0x84] sm:$0xff] %v564
  %629 = vst [vmem:[%s2 + $0x8c] sm:$0xf] %v565
  %630 = vst [vmem:[%s2 + $0x90] sm:$0xff] %v566
  %631 = vst [vmem:[%s2 + $0x98] sm:$0xf] %v567
  %632 = vst [vmem:[%s2 + $0x9c] sm:$0xff] %v568
  %633 = vst [vmem:[%s2 + $0xa4] sm:$0xf] %v569
  %634 = vst [vmem:[%s2 + $0xa8] sm:$0xff] %v570
  %635 = vst [vmem:[%s2 + $0xb0] sm:$0xf] %v571
  %636 = vst [vmem:[%s2 + $0xb4] sm:$0xff] %v572
  %637 = vst [vmem:[%s2 + $0xbc] sm:$0xf] %v573
  // Predicated region
  $region10: #{graph_feature_extractor.7} parent=0 // pred_check
    _
  $region11: #{graph_feature_extractor.7} parent=0 // pred_check_branch
    %639 = sbr.rel (0) target = $region13
  $region12: #{graph_feature_extractor.7} parent=0 // pred_region
    _
  $region13: #{graph_feature_extractor.7} parent=0 // pred_fallthru
    _
  // Predicated region
  $region14: #{graph_feature_extractor.7} parent=0 // pred_check
    _
  $region15: #{graph_feature_extractor.7} parent=0 // pred_check_branch
    %641 = sbr.rel (0) target = $region17
  $region16: #{graph_feature_extractor.7} parent=0 // pred_region
    _
  $region17: #{graph_feature_extractor.7} parent=0 // pred_fallthru
    _

// kernel: graph_feature_extractor.11
$region0: #{graph_feature_extractor.11}
  #allocation0 [shape = 'u32[]', space=smem, size = 0x4, offset = 0x4, fixed_abs, tag = 'smem constant byte address 0x4 - core index']
  #allocation1 [shape = 'u32[144,128]{1,0:T(1,128)}', space=vmem, size = 0x12000, scoped, tag = 'internal scratch']
  %s0 = inlined_call_operand.vmem [shape: bf16[16,128], index: 0, kind: input, shape index: {}]
  %s1 = inlined_call_operand.vmem [shape: bf16[128,128], index: 1, kind: input, shape index: {}]
  %s2 = inlined_call_operand.vmem [shape: bf16[128,128], index: 2, kind: input, shape index: {}]
  %s3 = inlined_call_operand.vmem [shape: bf16[128,128], index: 3, kind: input, shape index: {}]
  %s4 = inlined_call_operand.vmem [shape: bf16[384,128], index: 4, kind: input, shape index: {}]
  %s5 = inlined_call_operand.vmem [shape: f32[1,128], index: 5, kind: input, shape index: {}]
  %s6 = inlined_call_operand.vmem [shape: f32[1,128], index: 6, kind: input, shape index: {}]
  %s7 = inlined_call_operand.vmem [shape: f32[1,128], index: 7, kind: input, shape index: {}]
  %s8 = inlined_call_operand.hbm [shape: f32[16,128], index: 8, kind: output, shape index: {}]
  %s9 = sld [smem:[#allocation0]]
  $region42: #{graph_feature_extractor.11} parent=0
    _
  %s11 = ssub.s32 1, %s9
  %s12 = scalar_select 0, %s11, %s9
  $region1: #{graph_feature_extractor.11} parent=0
    #allocation2 [shape = 'u8[8192]{0}', space=vmem, size = 0x2000, scoped, tag = 'output window, operand 0, single buffered']
    #allocation3 [shape = 's32[1]{0}', space=sflag, size = 0x4, scoped, tag = 'scoped memory for graph_feature_extractor.11']
    %13 = vsyncpa [#allocation3], 0
    // Predicated region
    $region2: #{graph_feature_extractor.11} parent=1 // pred_check
      _
    $region3: #{graph_feature_extractor.11} parent=1 // pred_check_branch
      %15 = sbr.rel (0) target = $region5
    $region4: #{graph_feature_extractor.11} parent=1 // pred_region
      _
    $region5: #{graph_feature_extractor.11} parent=1 // pred_fallthru
      _
    // Predicated region
    $region6: #{graph_feature_extractor.11} parent=1 // pred_check
      _
    $region7: #{graph_feature_extractor.11} parent=1 // pred_check_branch
      %17 = sbr.rel (0) target = $region9
    $region8: #{graph_feature_extractor.11} parent=1 // pred_region
      _
    $region9: #{graph_feature_extractor.11} parent=1 // pred_fallthru
      _
    // Predicated region
    $region10: #{graph_feature_extractor.11} parent=1 // pred_check
      _
    $region11: #{graph_feature_extractor.11} parent=1 // pred_check_branch
      %19 = sbr.rel (0) target = $region13
    $region12: #{graph_feature_extractor.11} parent=1 // pred_region
      _
    $region13: #{graph_feature_extractor.11} parent=1 // pred_fallthru
      _
    // Predicated region
    $region14: #{graph_feature_extractor.11} parent=1 // pred_check
      _
    $region15: #{graph_feature_extractor.11} parent=1 // pred_check_branch
      %21 = sbr.rel (0) target = $region17
    $region16: #{graph_feature_extractor.11} parent=1 // pred_region
      _
    $region17: #{graph_feature_extractor.11} parent=1 // pred_fallthru
      _
    // Predicated region
    $region18: #{graph_feature_extractor.11} parent=1 // pred_check
      _
    $region19: #{graph_feature_extractor.11} parent=1 // pred_check_branch
      %23 = sbr.rel (0) target = $region21
    $region20: #{graph_feature_extractor.11} parent=1 // pred_region
      _
    $region21: #{graph_feature_extractor.11} parent=1 // pred_fallthru
      _
    // Predicated region
    $region22: #{graph_feature_extractor.11} parent=1 // pred_check
      _
    $region23: #{graph_feature_extractor.11} parent=1 // pred_check_branch
      %25 = sbr.rel (0) target = $region25
    $region24: #{graph_feature_extractor.11} parent=1 // pred_region
      _
    $region25: #{graph_feature_extractor.11} parent=1 // pred_fallthru
      _
    // Predicated region
    $region26: #{graph_feature_extractor.11} parent=1 // pred_check
      _
    $region27: #{graph_feature_extractor.11} parent=1 // pred_check_branch
      %27 = sbr.rel (0) target = $region29
    $region28: #{graph_feature_extractor.11} parent=1 // pred_region
      _
    $region29: #{graph_feature_extractor.11} parent=1 // pred_fallthru
      _
    // Predicated region
    $region30: #{graph_feature_extractor.11} parent=1 // pred_check
      _
    $region31: #{graph_feature_extractor.11} parent=1 // pred_check_branch
      %29 = sbr.rel (0) target = $region33
    $region32: #{graph_feature_extractor.11} parent=1 // pred_region
      _
    $region33: #{graph_feature_extractor.11} parent=1 // pred_fallthru
      _
    %v31 = vld [vmem:[%s0] sm:$0xf]
    %v32 = vld [vmem:[%s0 + $0x4] sm:$0xf]
    %v33 = vld [vmem:[%s1] sm:$0xf]
    %v34 = vld [vmem:[%s1 + $0x4] sm:$0xf]
    %v35 = vld [vmem:[%s1 + $0x8] sm:$0xf]
    %v36 = vld [vmem:[%s1 + $0xc] sm:$0xf]
    %v37 = vld [vmem:[%s1 + $0x10] sm:$0xf]
    %v38 = vld [vmem:[%s1 + $0x14] sm:$0xf]
    %v39 = vld [vmem:[%s1 + $0x18] sm:$0xf]
    %v40 = vld [vmem:[%s1 + $0x1c] sm:$0xf]
    %v41 = vld [vmem:[%s1 + $0x20] sm:$0xf]
    %v42 = vld [vmem:[%s1 + $0x24] sm:$0xf]
    %v43 = vld [vmem:[%s1 + $0x28] sm:$0xf]
    %v44 = vld [vmem:[%s1 + $0x2c] sm:$0xf]
    %v45 = vld [vmem:[%s1 + $0x30] sm:$0xf]
    %v46 = vld [vmem:[%s1 + $0x34] sm:$0xf]
    %v47 = vld [vmem:[%s1 + $0x38] sm:$0xf]
    %v48 = vld [vmem:[%s1 + $0x3c] sm:$0xf]
    %v51 = vunpack.c.l.b16 %v31
    %v52 = vunpack.c.l.b16 %v32
    %v53 = vpack.c.b16 %v52, %v51
    %v71 = vunpack.c.l.b16 %v33
    %v72 = vunpack.c.l.b16 %v34
    %v73 = vunpack.c.l.b16 %v35
    %v74 = vunpack.c.l.b16 %v36
    %v75 = vunpack.c.l.b16 %v37
    %v76 = vunpack.c.l.b16 %v38
    %v77 = vunpack.c.l.b16 %v39
    %v78 = vunpack.c.l.b16 %v40
    %v79 = vunpack.c.l.b16 %v41
    %v80 = vunpack.c.l.b16 %v42
    %v81 = vunpack.c.l.b16 %v43
    %v82 = vunpack.c.l.b16 %v44
    %v83 = vunpack.c.l.b16 %v45
    %v84 = vunpack.c.l.b16 %v46
    %v85 = vunpack.c.l.b16 %v47
    %v86 = vunpack.c.l.b16 %v48
    %v87 = vpack.c.b16 %v72, %v71
    %v88 = vpack.c.b16 %v74, %v73
    %v89 = vpack.c.b16 %v76, %v75
    %v90 = vpack.c.b16 %v78, %v77
    %v91 = vpack.c.b16 %v80, %v79
    %v92 = vpack.c.b16 %v82, %v81
    %v93 = vpack.c.b16 %v84, %v83
    %v94 = vpack.c.b16 %v86, %v85
    %103 = vmatprep.subr.bf16.mxu0 0
    %104 = vmatpush1.bf16.msra.mxu0 %v87
    %105 = vmatprep.subr.bf16.mxu0 0
    %106 = vmatpush1.bf16.msra.mxu0 %v88
    %107 = vmatprep.subr.bf16.mxu0 0
    %108 = vmatpush1.bf16.msra.mxu0 %v89
    %109 = vmatprep.subr.bf16.mxu0 0
    %110 = vmatpush1.bf16.msra.mxu0 %v90
    %111 = vmatprep.subr.bf16.mxu0 0
    %112 = vmatpush1.bf16.msra.mxu0 %v91
    %113 = vmatprep.subr.bf16.mxu0 0
    %114 = vmatpush1.bf16.msra.mxu0 %v92
    %115 = vmatprep.subr.bf16.mxu0 0
    %116 = vmatpush1.bf16.msra.mxu0 %v93
    %117 = vmatprep.subr.bf16.mxu0 0
    %118 = vmatpush1.bf16.msra.mxu0 %v94
    %119 = vmatprep.subr.bf16.mxu0 0
    %120 = vmatpush1.bf16.msra.mxu0 0
    %121 = vmatprep.subr.bf16.mxu0 0
    %122 = vmatpush1.bf16.msra.mxu0 0
    %123 = vmatprep.subr.bf16.mxu0 0
    %124 = vmatpush1.bf16.msra.mxu0 0
    %125 = vmatprep.subr.bf16.mxu0 0
    %126 = vmatpush1.bf16.msra.mxu0 0
    %127 = vmatprep.subr.bf16.mxu0 0
    %128 = vmatpush1.bf16.msra.mxu0 0
    %129 = vmatprep.subr.bf16.mxu0 0
    %130 = vmatpush1.bf16.msra.mxu0 0
    %131 = vmatprep.subr.bf16.mxu0 0
    %132 = vmatpush1.bf16.msra.mxu0 0
    %133 = vmatprep.subr.bf16.mxu0 0
    %134 = vmatpush1.bf16.msra.mxu0 0
    %135 = vmatprep.mubr.bf16.mxu0 0
    %136 = vmatmul.mubr.bf16.gmra.mrb[0].mxu0 %v53
    %v137 = vpop.f32.mrb[0].mxu0
    %v138 = vadd.f32 0.0, %v137
    %v139 = vpop.f32.mrb[0].mxu0
    %v140 = vpop.f32.mrb[0].mxu0
    %v141 = vadd.f32 0.0, %v140
    %v142 = vpop.f32.mrb[0].mxu0
    %143 = vdwg.mxu0
    %v144 = vld [vmem:[%s2] sm:$0xf]
    %v145 = vld [vmem:[%s2 + $0x4] sm:$0xf]
    %v146 = vld [vmem:[%s2 + $0x8] sm:$0xf]
    %v147 = vld [vmem:[%s2 + $0xc] sm:$0xf]
    %v148 = vld [vmem:[%s2 + $0x10] sm:$0xf]
    %v149 = vld [vmem:[%s2 + $0x14] sm:$0xf]
    %v150 = vld [vmem:[%s2 + $0x18] sm:$0xf]
    %v151 = vld [vmem:[%s2 + $0x1c] sm:$0xf]
    %v152 = vld [vmem:[%s2 + $0x20] sm:$0xf]
    %v153 = vld [vmem:[%s2 + $0x24] sm:$0xf]
    %v154 = vld [vmem:[%s2 + $0x28] sm:$0xf]
    %v155 = vld [vmem:[%s2 + $0x2c] sm:$0xf]
    %v156 = vld [vmem:[%s2 + $0x30] sm:$0xf]
    %v157 = vld [vmem:[%s2 + $0x34] sm:$0xf]
    %v158 = vld [vmem:[%s2 + $0x38] sm:$0xf]
    %v159 = vld [vmem:[%s2 + $0x3c] sm:$0xf]
    %v176 = vunpack.c.l.b16 %v144
    %v177 = vunpack.c.l.b16 %v145
    %v178 = vunpack.c.l.b16 %v146
    %v179 = vunpack.c.l.b16 %v147
    %v180 = vunpack.c.l.b16 %v148
    %v181 = vunpack.c.l.b16 %v149
    %v182 = vunpack.c.l.b16 %v150
    %v183 = vunpack.c.l.b16 %v151
    %v184 = vunpack.c.l.b16 %v152
    %v185 = vunpack.c.l.b16 %v153
    %v186 = vunpack.c.l.b16 %v154
    %v187 = vunpack.c.l.b16 %v155
    %v188 = vunpack.c.l.b16 %v156
    %v189 = vunpack.c.l.b16 %v157
    %v190 = vunpack.c.l.b16 %v158
    %v191 = vunpack.c.l.b16 %v159
    %v192 = vpack.c.b16 %v177, %v176
    %v193 = vpack.c.b16 %v179, %v178
    %v194 = vpack.c.b16 %v181, %v180
    %v195 = vpack.c.b16 %v183, %v182
    %v196 = vpack.c.b16 %v185, %v184
    %v197 = vpack.c.b16 %v187, %v186
    %v198 = vpack.c.b16 %v189, %v188
    %v199 = vpack.c.b16 %v191, %v190
    %208 = vmatprep.subr.bf16.mxu0 0
    %209 = vmatpush1.bf16.msra.mxu0 %v192
    %210 = vmatprep.subr.bf16.mxu0 0
    %211 = vmatpush1.bf16.msra.mxu0 %v193
    %212 = vmatprep.subr.bf16.mxu0 0
    %213 = vmatpush1.bf16.msra.mxu0 %v194
    %214 = vmatprep.subr.bf16.mxu0 0
    %215 = vmatpush1.bf16.msra.mxu0 %v195
    %216 = vmatprep.subr.bf16.mxu0 0
    %217 = vmatpush1.bf16.msra.mxu0 %v196
    %218 = vmatprep.subr.bf16.mxu0 0
    %219 = vmatpush1.bf16.msra.mxu0 %v197
    %220 = vmatprep.subr.bf16.mxu0 0
    %221 = vmatpush1.bf16.msra.mxu0 %v198
    %222 = vmatprep.subr.bf16.mxu0 0
    %223 = vmatpush1.bf16.msra.mxu0 %v199
    %224 = vmatprep.subr.bf16.mxu0 0
    %225 = vmatpush1.bf16.msra.mxu0 0
    %226 = vmatprep.subr.bf16.mxu0 0
    %227 = vmatpush1.bf16.msra.mxu0 0
    %228 = vmatprep.subr.bf16.mxu0 0
    %229 = vmatpush1.bf16.msra.mxu0 0
    %230 = vmatprep.subr.bf16.mxu0 0
    %231 = vmatpush1.bf16.msra.mxu0 0
    %232 = vmatprep.subr.bf16.mxu0 0
    %233 = vmatpush1.bf16.msra.mxu0 0
    %234 = vmatprep.subr.bf16.mxu0 0
    %235 = vmatpush1.bf16.msra.mxu0 0
    %236 = vmatprep.subr.bf16.mxu0 0
    %237 = vmatpush1.bf16.msra.mxu0 0
    %238 = vmatprep.subr.bf16.mxu0 0
    %239 = vmatpush1.bf16.msra.mxu0 0
    %240 = vmatprep.mubr.bf16.mxu0 0
    %241 = vmatmul.mubr.bf16.gmra.mrb[0].mxu0 %v53
    %v242 = vpop.f32.mrb[0].mxu0
    %v243 = vadd.f32 0.0, %v242
    %v244 = vpop.f32.mrb[0].mxu0
    %v245 = vpop.f32.mrb[0].mxu0
    %v246 = vadd.f32 0.0, %v245
    %v247 = vpop.f32.mrb[0].mxu0
    %248 = vdwg.mxu0
    %v249 = vld [vmem:[%s3] sm:$0xf]
    %v250 = vld [vmem:[%s3 + $0x4] sm:$0xf]
    %v251 = vld [vmem:[%s3 + $0x8] sm:$0xf]
    %v252 = vld [vmem:[%s3 + $0xc] sm:$0xf]
    %v253 = vld [vmem:[%s3 + $0x10] sm:$0xf]
    %v254 = vld [vmem:[%s3 + $0x14] sm:$0xf]
    %v255 = vld [vmem:[%s3 + $0x18] sm:$0xf]
    %v256 = vld [vmem:[%s3 + $0x1c] sm:$0xf]
    %v257 = vld [vmem:[%s3 + $0x20] sm:$0xf]
    %v258 = vld [vmem:[%s3 + $0x24] sm:$0xf]
    %v259 = vld [vmem:[%s3 + $0x28] sm:$0xf]
    %v260 = vld [vmem:[%s3 + $0x2c] sm:$0xf]
    %v261 = vld [vmem:[%s3 + $0x30] sm:$0xf]
    %v262 = vld [vmem:[%s3 + $0x34] sm:$0xf]
    %v263 = vld [vmem:[%s3 + $0x38] sm:$0xf]
    %v264 = vld [vmem:[%s3 + $0x3c] sm:$0xf]
    %v281 = vunpack.c.l.b16 %v249
    %v282 = vunpack.c.l.b16 %v250
    %v283 = vunpack.c.l.b16 %v251
    %v284 = vunpack.c.l.b16 %v252
    %v285 = vunpack.c.l.b16 %v253
    %v286 = vunpack.c.l.b16 %v254
    %v287 = vunpack.c.l.b16 %v255
    %v288 = vunpack.c.l.b16 %v256
    %v289 = vunpack.c.l.b16 %v257
    %v290 = vunpack.c.l.b16 %v258
    %v291 = vunpack.c.l.b16 %v259
    %v292 = vunpack.c.l.b16 %v260
    %v293 = vunpack.c.l.b16 %v261
    %v294 = vunpack.c.l.b16 %v262
    %v295 = vunpack.c.l.b16 %v263
    %v296 = vunpack.c.l.b16 %v264
    %v297 = vpack.c.b16 %v282, %v281
    %v298 = vpack.c.b16 %v284, %v283
    %v299 = vpack.c.b16 %v286, %v285
    %v300 = vpack.c.b16 %v288, %v287
    %v301 = vpack.c.b16 %v290, %v289
    %v302 = vpack.c.b16 %v292, %v291
    %v303 = vpack.c.b16 %v294, %v293
    %v304 = vpack.c.b16 %v296, %v295
    %313 = vmatprep.subr.bf16.mxu0 0
    %314 = vmatpush1.bf16.msra.mxu0 %v297
    %315 = vmatprep.subr.bf16.mxu0 0
    %316 = vmatpush1.bf16.msra.mxu0 %v298
    %317 = vmatprep.subr.bf16.mxu0 0
    %318 = vmatpush1.bf16.msra.mxu0 %v299
    %319 = vmatprep.subr.bf16.mxu0 0
    %320 = vmatpush1.bf16.msra.mxu0 %v300
    %321 = vmatprep.subr.bf16.mxu0 0
    %322 = vmatpush1.bf16.msra.mxu0 %v301
    %323 = vmatprep.subr.bf16.mxu0 0
    %324 = vmatpush1.bf16.msra.mxu0 %v302
    %325 = vmatprep.subr.bf16.mxu0 0
    %326 = vmatpush1.bf16.msra.mxu0 %v303
    %327 = vmatprep.subr.bf16.mxu0 0
    %328 = vmatpush1.bf16.msra.mxu0 %v304
    %329 = vmatprep.subr.bf16.mxu0 0
    %330 = vmatpush1.bf16.msra.mxu0 0
    %331 = vmatprep.subr.bf16.mxu0 0
    %332 = vmatpush1.bf16.msra.mxu0 0
    %333 = vmatprep.subr.bf16.mxu0 0
    %334 = vmatpush1.bf16.msra.mxu0 0
    %335 = vmatprep.subr.bf16.mxu0 0
    %336 = vmatpush1.bf16.msra.mxu0 0
    %337 = vmatprep.subr.bf16.mxu0 0
    %338 = vmatpush1.bf16.msra.mxu0 0
    %339 = vmatprep.subr.bf16.mxu0 0
    %340 = vmatpush1.bf16.msra.mxu0 0
    %341 = vmatprep.subr.bf16.mxu0 0
    %342 = vmatpush1.bf16.msra.mxu0 0
    %343 = vmatprep.subr.bf16.mxu0 0
    %344 = vmatpush1.bf16.msra.mxu0 0
    %345 = vmatprep.mubr.bf16.mxu0 0
    %346 = vmatmul.mubr.bf16.gmra.mrb[0].mxu0 %v53
    %v347 = vpop.f32.mrb[0].mxu0
    %v348 = vadd.f32 0.0, %v347
    %v349 = vpop.f32.mrb[0].mxu0
    %v350 = vpop.f32.mrb[0].mxu0
    %v351 = vadd.f32 0.0, %v350
    %v352 = vpop.f32.mrb[0].mxu0
    %353 = vdwg.mxu0
    %v354 = vpack.c.bf16 %v141, %v138
    %v355 = vpack.c.bf16 %v246, %v243
    %v356 = vpack.c.bf16 %v351, %v348
    %v357 = vld [vmem:[%s4] sm:$0xf]
    %v358 = vld [vmem:[%s4 + $0x4] sm:$0xf]
    %v359 = vld [vmem:[%s4 + $0x8] sm:$0xf]
    %v360 = vld [vmem:[%s4 + $0xc] sm:$0xf]
    %v361 = vld [vmem:[%s4 + $0x10] sm:$0xf]
    %v362 = vld [vmem:[%s4 + $0x14] sm:$0xf]
    %v363 = vld [vmem:[%s4 + $0x18] sm:$0xf]
    %v364 = vld [vmem:[%s4 + $0x1c] sm:$0xf]
    %v365 = vld [vmem:[%s4 + $0x20] sm:$0xf]
    %v366 = vld [vmem:[%s4 + $0x24] sm:$0xf]
    %v367 = vld [vmem:[%s4 + $0x28] sm:$0xf]
    %v368 = vld [vmem:[%s4 + $0x2c] sm:$0xf]
    %v369 = vld [vmem:[%s4 + $0x30] sm:$0xf]
    %v370 = vld [vmem:[%s4 + $0x34] sm:$0xf]
    %v371 = vld [vmem:[%s4 + $0x38] sm:$0xf]
    %v372 = vld [vmem:[%s4 + $0x3c] sm:$0xf]
    %v373 = vld [vmem:[%s4 + $0x40] sm:$0xf]
    %v374 = vld [vmem:[%s4 + $0x44] sm:$0xf]
    %v375 = vld [vmem:[%s4 + $0x48] sm:$0xf]
    %v376 = vld [vmem:[%s4 + $0x4c] sm:$0xf]
    %v377 = vld [vmem:[%s4 + $0x50] sm:$0xf]
    %v378 = vld [vmem:[%s4 + $0x54] sm:$0xf]
    %v379 = vld [vmem:[%s4 + $0x58] sm:$0xf]
    %v380 = vld [vmem:[%s4 + $0x5c] sm:$0xf]
    %v381 = vld [vmem:[%s4 + $0x60] sm:$0xf]
    %v382 = vld [vmem:[%s4 + $0x64] sm:$0xf]
    %v383 = vld [vmem:[%s4 + $0x68] sm:$0xf]
    %v384 = vld [vmem:[%s4 + $0x6c] sm:$0xf]
    %v385 = vld [vmem:[%s4 + $0x70] sm:$0xf]
    %v386 = vld [vmem:[%s4 + $0x74] sm:$0xf]
    %v387 = vld [vmem:[%s4 + $0x78] sm:$0xf]
    %v388 = vld [vmem:[%s4 + $0x7c] sm:$0xf]
    %v389 = vld [vmem:[%s4 + $0x80] sm:$0xf]
    %v390 = vld [vmem:[%s4 + $0x84] sm:$0xf]
    %v391 = vld [vmem:[%s4 + $0x88] sm:$0xf]
    %v392 = vld [vmem:[%s4 + $0x8c] sm:$0xf]
    %v393 = vld [vmem:[%s4 + $0x90] sm:$0xf]
    %v394 = vld [vmem:[%s4 + $0x94] sm:$0xf]
    %v395 = vld [vmem:[%s4 + $0x98] sm:$0xf]
    %v396 = vld [vmem:[%s4 + $0x9c] sm:$0xf]
    %v397 = vld [vmem:[%s4 + $0xa0] sm:$0xf]
    %v398 = vld [vmem:[%s4 + $0xa4] sm:$0xf]
    %v399 = vld [vmem:[%s4 + $0xa8] sm:$0xf]
    %v400 = vld [vmem:[%s4 + $0xac] sm:$0xf]
    %v401 = vld [vmem:[%s4 + $0xb0] sm:$0xf]
    %v402 = vld [vmem:[%s4 + $0xb4] sm:$0xf]
    %v403 = vld [vmem:[%s4 + $0xb8] sm:$0xf]
    %v404 = vld [vmem:[%s4 + $0xbc] sm:$0xf]
    %v405 = vld [vmem:[%s5] sm:$0x1]
    %v407 = vlaneseq
    %v408 = vshrl.u32 %v407, 7
    %v409 = vsub.s32 0, %v408
    %v410 = vrot.slane %v405, %v409
    %v460 = vunpack.c.l.b16 %v357
    %v461 = vunpack.c.l.b16 %v358
    %v462 = vunpack.c.l.b16 %v359
    %v463 = vunpack.c.l.b16 %v360
    %v464 = vunpack.c.l.b16 %v361
    %v465 = vunpack.c.l.b16 %v362
    %v466 = vunpack.c.l.b16 %v363
    %v467 = vunpack.c.l.b16 %v364
    %v468 = vunpack.c.l.b16 %v365
    %v469 = vunpack.c.l.b16 %v366
    %v470 = vunpack.c.l.b16 %v367
    %v471 = vunpack.c.l.b16 %v368
    %v472 = vunpack.c.l.b16 %v369
    %v473 = vunpack.c.l.b16 %v370
    %v474 = vunpack.c.l.b16 %v371
    %v475 = vunpack.c.l.b16 %v372
    %v476 = vunpack.c.l.b16 %v373
    %v477 = vunpack.c.l.b16 %v374
    %v478 = vunpack.c.l.b16 %v375
    %v479 = vunpack.c.l.b16 %v376
    %v480 = vunpack.c.l.b16 %v377
    %v481 = vunpack.c.l.b16 %v378
    %v482 = vunpack.c.l.b16 %v379
    %v483 = vunpack.c.l.b16 %v380
    %v484 = vunpack.c.l.b16 %v381
    %v485 = vunpack.c.l.b16 %v382
    %v486 = vunpack.c.l.b16 %v383
    %v487 = vunpack.c.l.b16 %v384
    %v488 = vunpack.c.l.b16 %v385
    %v489 = vunpack.c.l.b16 %v386
    %v490 = vunpack.c.l.b16 %v387
    %v491 = vunpack.c.l.b16 %v388
    %v492 = vunpack.c.l.b16 %v389
    %v493 = vunpack.c.l.b16 %v390
    %v494 = vunpack.c.l.b16 %v391
    %v495 = vunpack.c.l.b16 %v392
    %v496 = vunpack.c.l.b16 %v393
    %v497 = vunpack.c.l.b16 %v394
    %v498 = vunpack.c.l.b16 %v395
    %v499 = vunpack.c.l.b16 %v396
    %v500 = vunpack.c.l.b16 %v397
    %v501 = vunpack.c.l.b16 %v398
    %v502 = vunpack.c.l.b16 %v399
    %v503 = vunpack.c.l.b16 %v400
    %v504 = vunpack.c.l.b16 %v401
    %v505 = vunpack.c.l.b16 %v402
    %v506 = vunpack.c.l.b16 %v403
    %v507 = vunpack.c.l.b16 %v404
    %v508 = vpack.c.b16 %v461, %v460
    %v509 = vpack.c.b16 %v463, %v462
    %v510 = vpack.c.b16 %v465, %v464
    %v511 = vpack.c.b16 %v467, %v466
    %v512 = vpack.c.b16 %v469, %v468
    %v513 = vpack.c.b16 %v471, %v470
    %v514 = vpack.c.b16 %v473, %v472
    %v515 = vpack.c.b16 %v475, %v474
    %v516 = vpack.c.b16 %v477, %v476
    %v517 = vpack.c.b16 %v479, %v478
    %v518 = vpack.c.b16 %v481, %v480
    %v519 = vpack.c.b16 %v483, %v482
    %v520 = vpack.c.b16 %v485, %v484
    %v521 = vpack.c.b16 %v487, %v486
    %v522 = vpack.c.b16 %v489, %v488
    %v523 = vpack.c.b16 %v491, %v490
    %v524 = vpack.c.b16 %v493, %v492
    %v525 = vpack.c.b16 %v495, %v494
    %v526 = vpack.c.b16 %v497, %v496
    %v527 = vpack.c.b16 %v499, %v498
    %v528 = vpack.c.b16 %v501, %v500
    %v529 = vpack.c.b16 %v503, %v502
    %v530 = vpack.c.b16 %v505, %v504
    %v531 = vpack.c.b16 %v507, %v506
    %556 = vmatprep.subr.bf16.mxu0 0
    %557 = vmatpush1.bf16.msra.mxu0 %v508
    %558 = vmatprep.subr.bf16.mxu0 0
    %559 = vmatpush1.bf16.msra.mxu0 %v509
    %560 = vmatprep.subr.bf16.mxu0 0
    %561 = vmatpush1.bf16.msra.mxu0 %v510
    %562 = vmatprep.subr.bf16.mxu0 0
    %563 = vmatpush1.bf16.msra.mxu0 %v511
    %564 = vmatprep.subr.bf16.mxu0 0
    %565 = vmatpush1.bf16.msra.mxu0 %v512
    %566 = vmatprep.subr.bf16.mxu0 0
    %567 = vmatpush1.bf16.msra.mxu0 %v513
    %568 = vmatprep.subr.bf16.mxu0 0
    %569 = vmatpush1.bf16.msra.mxu0 %v514
    %570 = vmatprep.subr.bf16.mxu0 0
    %571 = vmatpush1.bf16.msra.mxu0 %v515
    %572 = vmatprep.subr.bf16.mxu0 0
    %573 = vmatpush1.bf16.msra.mxu0 %v516
    %574 = vmatprep.subr.bf16.mxu0 0
    %575 = vmatpush1.bf16.msra.mxu0 %v517
    %576 = vmatprep.subr.bf16.mxu0 0
    %577 = vmatpush1.bf16.msra.mxu0 %v518
    %578 = vmatprep.subr.bf16.mxu0 0
    %579 = vmatpush1.bf16.msra.mxu0 %v519
    %580 = vmatprep.subr.bf16.mxu0 0
    %581 = vmatpush1.bf16.msra.mxu0 %v520
    %582 = vmatprep.subr.bf16.mxu0 0
    %583 = vmatpush1.bf16.msra.mxu0 %v521
    %584 = vmatprep.subr.bf16.mxu0 0
    %585 = vmatpush1.bf16.msra.mxu0 %v522
    %586 = vmatprep.subr.bf16.mxu0 0
    %587 = vmatpush1.bf16.msra.mxu0 %v523
    %588 = vmatprep.mubr.bf16.mxu0 %v355
    %589 = vmatmul.mubr.bf16.gmra.mrb[0].mxu0 %v354
    %v590 = vpop.f32.mrb[0].mxu0
    %v591 = vadd.f32 %v410, %v590
    %v592 = vpop.f32.mrb[0].mxu0
    %v593 = vpop.f32.mrb[0].mxu0
    %v594 = vadd.f32 %v410, %v593
    %v595 = vpop.f32.mrb[0].mxu0
    %596 = vdwg.mxu0
    %597 = vmatprep.subr.bf16.mxu0 0
    %598 = vmatpush1.bf16.msra.mxu0 %v524
    %599 = vmatprep.subr.bf16.mxu0 0
    %600 = vmatpush1.bf16.msra.mxu0 %v525
    %601 = vmatprep.subr.bf16.mxu0 0
    %602 = vmatpush1.bf16.msra.mxu0 %v526
    %603 = vmatprep.subr.bf16.mxu0 0
    %604 = vmatpush1.bf16.msra.mxu0 %v527
    %605 = vmatprep.subr.bf16.mxu0 0
    %606 = vmatpush1.bf16.msra.mxu0 %v528
    %607 = vmatprep.subr.bf16.mxu0 0
    %608 = vmatpush1.bf16.msra.mxu0 %v529
    %609 = vmatprep.subr.bf16.mxu0 0
    %610 = vmatpush1.bf16.msra.mxu0 %v530
    %611 = vmatprep.subr.bf16.mxu0 0
    %612 = vmatpush1.bf16.msra.mxu0 %v531
    %613 = vmatprep.subr.bf16.mxu0 0
    %614 = vmatpush1.bf16.msra.mxu0 0
    %615 = vmatprep.subr.bf16.mxu0 0
    %616 = vmatpush1.bf16.msra.mxu0 0
    %617 = vmatprep.subr.bf16.mxu0 0
    %618 = vmatpush1.bf16.msra.mxu0 0
    %619 = vmatprep.subr.bf16.mxu0 0
    %620 = vmatpush1.bf16.msra.mxu0 0
    %621 = vmatprep.subr.bf16.mxu0 0
    %622 = vmatpush1.bf16.msra.mxu0 0
    %623 = vmatprep.subr.bf16.mxu0 0
    %624 = vmatpush1.bf16.msra.mxu0 0
    %625 = vmatprep.subr.bf16.mxu0 0
    %626 = vmatpush1.bf16.msra.mxu0 0
    %627 = vmatprep.subr.bf16.mxu0 0
    %628 = vmatpush1.bf16.msra.mxu0 0
    %629 = vmatprep.mubr.bf16.mxu0 0
    %630 = vmatmul.mubr.bf16.gmra.mrb[0].mxu0 %v356
    %v631 = vpop.f32.mrb[0].mxu0
    %v632 = vadd.f32 %v591, %v631
    %v633 = vpop.f32.mrb[0].mxu0
    %v634 = vpop.f32.mrb[0].mxu0
    %v635 = vadd.f32 %v594, %v634
    %v636 = vpop.f32.mrb[0].mxu0
    %637 = vdwg.mxu0
    %638 = vadd.xlane.f32.xlu0 %v632
    %v639 = vpop.xlane.xlu0 %638
    %640 = vadd.xlane.f32.xlu0 %v635
    %v641 = vpop.xlane.xlu0 %640
    %v642 = vrcp.pop 128.0
    %v643 = vmul.f32 %v639, %v642
    %v644 = vmul.f32 %v641, %v642
    %v645 = vsub.f32 %v632, %v643
    %v646 = vsub.f32 %v635, %v644
    %v647 = vmul.f32 %v645, %v645
    %v648 = vmul.f32 %v646, %v646
    %649 = vadd.xlane.f32.xlu0 %v647
    %v650 = vpop.xlane.xlu0 %649
    %651 = vadd.xlane.f32.xlu0 %v648
    %v652 = vpop.xlane.xlu0 %651
    %v653 = vmul.f32 %v650, %v642
    %v654 = vmul.f32 %v652, %v642
    %v655 = vadd.f32 %v653, 1e-05
    %v656 = vadd.f32 %v654, 1e-05
    %v657 = vrsqrt.pop %v655
    %v658 = vrsqrt.pop %v656
    %v659 = vmul.f32 %v645, %v657
    %v660 = vmul.f32 %v646, %v658
    %v661 = vld [vmem:[%s6] sm:$0x1]
    %v663 = vlaneseq
    %v664 = vshrl.u32 %v663, 7
    %v665 = vsub.s32 0, %v664
    %v666 = vrot.slane %v661, %v665
    %v668 = vmul.f32 %v659, %v666
    %v669 = vmul.f32 %v660, %v666
    %v670 = vld [vmem:[%s7] sm:$0x1]
    %v672 = vlaneseq
    %v673 = vshrl.u32 %v672, 7
    %v674 = vsub.s32 0, %v673
    %v675 = vrot.slane %v670, %v674
    %v677 = vadd.f32 %v668, %v675
    %v678 = vadd.f32 %v669, %v675
    %679 = vst [vmem:[#allocation2] sm:$0xff] %v677
    %680 = vst [vmem:[#allocation2 + $0x8] sm:$0xff] %v678
    // Predicated region
    $region34: #{graph_feature_extractor.11} parent=1 // pred_check
      _
    $region35: #{graph_feature_extractor.11} parent=1 // pred_check_branch
      %682 = sbr.rel (0) target = $region37
    $region36: #{graph_feature_extractor.11} parent=1 // pred_region
      %s684 = ssub.s32 256, 256
      %685 = vsyncadd [#allocation3], %s684
      %s686 = sshll.u32 [#allocation2], 4
      %s687 = int_to_ptr.vmem [resolvable:$true] %s686
      %692 = dma.vmem_to_hbm [thread:$0]  %s687, 256, %s8, [#allocation3], 128, 128, 8
    $region37: #{graph_feature_extractor.11} parent=1 // pred_fallthru
      _
    // Predicated region
    $region38: #{graph_feature_extractor.11} parent=1 // pred_check
      _
    $region39: #{graph_feature_extractor.11} parent=1 // pred_check_branch
      %694 = sbr.rel (0) target = $region41
    $region40: #{graph_feature_extractor.11} parent=1 // pred_region
      %695 = dma.done [#allocation3], 256
    $region41: #{graph_feature_extractor.11} parent=1 // pred_fallthru
      _
    %696 = vsyncpa [#allocation3], 1

// kernel: graph_feature_extractor.8
$region0: #{graph_feature_extractor.8}
  #allocation0 [shape = 'u32[]', space=smem, size = 0x4, offset = 0x4, fixed_abs, tag = 'smem constant byte address 0x4 - core index']
  #allocation1 [shape = 'u32[144,128]{1,0:T(1,128)}', space=vmem, size = 0x12000, scoped, tag = 'internal scratch']
  %s0 = inlined_call_operand.vmem [shape: bf16[128,128], index: 0, kind: input, shape index: {}]
  %s1 = inlined_call_operand.vmem [shape: bf16[128,384], index: 1, kind: input, shape index: {}]
  %s2 = inlined_call_operand.vmem [shape: s8[3,128,128], index: 2, kind: input, shape index: {}]
  %s3 = inlined_call_operand.vmem [shape: bf16[128,128], index: 3, kind: input, shape index: {}]
  %s4 = inlined_call_operand.vmem [shape: bf16[128,128], index: 4, kind: output, shape index: {}]
  %s5 = sld [smem:[#allocation0]]
  $region26: #{graph_feature_extractor.8} parent=0
    _
  %s7 = ssub.s32 1, %s5
  %s8 = scalar_select 0, %s7, %s5
  // Predicated region
  $region2: #{graph_feature_extractor.8} parent=0 // pred_check
    _
  $region3: #{graph_feature_extractor.8} parent=0 // pred_check_branch
    %10 = sbr.rel (0) target = $region5
  $region4: #{graph_feature_extractor.8} parent=0 // pred_region
    _
  $region5: #{graph_feature_extractor.8} parent=0 // pred_fallthru
    _
  // Predicated region
  $region6: #{graph_feature_extractor.8} parent=0 // pred_check
    _
  $region7: #{graph_feature_extractor.8} parent=0 // pred_check_branch
    %12 = sbr.rel (0) target = $region9
  $region8: #{graph_feature_extractor.8} parent=0 // pred_region
    _
  $region9: #{graph_feature_extractor.8} parent=0 // pred_fallthru
    _
  // Predicated region
  $region10: #{graph_feature_extractor.8} parent=0 // pred_check
    _
  $region11: #{graph_feature_extractor.8} parent=0 // pred_check_branch
    %14 = sbr.rel (0) target = $region13
  $region12: #{graph_feature_extractor.8} parent=0 // pred_region
    _
  $region13: #{graph_feature_extractor.8} parent=0 // pred_fallthru
    _
  // Predicated region
  $region14: #{graph_feature_extractor.8} parent=0 // pred_check
    _
  $region15: #{graph_feature_extractor.8} parent=0 // pred_check_branch
    %16 = sbr.rel (0) target = $region17
  $region16: #{graph_feature_extractor.8} parent=0 // pred_region
    _
  $region17: #{graph_feature_extractor.8} parent=0 // pred_fallthru
    _
  %v18 = vld [vmem:[%s0] sm:$0xf]
  %v19 = vld [vmem:[%s0 + $0x4] sm:$0xf]
  %v20 = vld [vmem:[%s0 + $0x8] sm:$0xf]
  %v21 = vld [vmem:[%s0 + $0xc] sm:$0xf]
  %v22 = vld [vmem:[%s0 + $0x10] sm:$0xf]
  %v23 = vld [vmem:[%s0 + $0x14] sm:$0xf]
  %v24 = vld [vmem:[%s0 + $0x18] sm:$0xf]
  %v25 = vld [vmem:[%s0 + $0x1c] sm:$0xf]
  %v26 = vld [vmem:[%s0 + $0x20] sm:$0xf]
  %v27 = vld [vmem:[%s0 + $0x24] sm:$0xf]
  %v28 = vld [vmem:[%s0 + $0x28] sm:$0xf]
  %v29 = vld [vmem:[%s0 + $0x2c] sm:$0xf]
  %v30 = vld [vmem:[%s0 + $0x30] sm:$0xf]
  %v31 = vld [vmem:[%s0 + $0x34] sm:$0xf]
  %v32 = vld [vmem:[%s0 + $0x38] sm:$0xf]
  %v33 = vld [vmem:[%s0 + $0x3c] sm:$0xf]
  %v34 = vld [vmem:[%s3] sm:$0xf]
  %v35 = vld [vmem:[%s3 + $0x4] sm:$0xf]
  %v36 = vld [vmem:[%s3 + $0x8] sm:$0xf]
  %v37 = vld [vmem:[%s3 + $0xc] sm:$0xf]
  %v38 = vld [vmem:[%s3 + $0x10] sm:$0xf]
  %v39 = vld [vmem:[%s3 + $0x14] sm:$0xf]
  %v40 = vld [vmem:[%s3 + $0x18] sm:$0xf]
  %v41 = vld [vmem:[%s3 + $0x1c] sm:$0xf]
  %v42 = vld [vmem:[%s3 + $0x20] sm:$0xf]
  %v43 = vld [vmem:[%s3 + $0x24] sm:$0xf]
  %v44 = vld [vmem:[%s3 + $0x28] sm:$0xf]
  %v45 = vld [vmem:[%s3 + $0x2c] sm:$0xf]
  %v46 = vld [vmem:[%s3 + $0x30] sm:$0xf]
  %v47 = vld [vmem:[%s3 + $0x34] sm:$0xf]
  %v48 = vld [vmem:[%s3 + $0x38] sm:$0xf]
  %v49 = vld [vmem:[%s3 + $0x3c] sm:$0xf]
  %v50 = vld [vmem:[%s2] sm:$0xff]
  %v51 = vld [vmem:[%s2 + $0x8] sm:$0xff]
  %v52 = vld [vmem:[%s2 + $0x10] sm:$0xff]
  %v53 = vld [vmem:[%s2 + $0x18] sm:$0xff]
  %v54 = vunpack.c.l.s8.bf16 %v50
  %v55 = vunpack.c.h.s8.bf16 %v50
  %v56 = vunpack.c.l.s8.bf16 %v51
  %v57 = vunpack.c.h.s8.bf16 %v51
  %v58 = vunpack.c.l.s8.bf16 %v52
  %v59 = vunpack.c.h.s8.bf16 %v52
  %v60 = vunpack.c.l.s8.bf16 %v53
  %v61 = vunpack.c.h.s8.bf16 %v53
  %v62 = vld [vmem:[%s1] sm:$0xf]
  %v63 = vld [vmem:[%s1 + $0xc] sm:$0xf]
  %v64 = vld [vmem:[%s1 + $0x18] sm:$0xf]
  %v65 = vld [vmem:[%s1 + $0x24] sm:$0xf]
  %v66 = vld [vmem:[%s1 + $0x30] sm:$0xf]
  %v67 = vld [vmem:[%s1 + $0x3c] sm:$0xf]
  %v68 = vld [vmem:[%s1 + $0x48] sm:$0xf]
  %v69 = vld [vmem:[%s1 + $0x54] sm:$0xf]
  %v70 = vld [vmem:[%s1 + $0x60] sm:$0xf]
  %v71 = vld [vmem:[%s1 + $0x6c] sm:$0xf]
  %v72 = vld [vmem:[%s1 + $0x78] sm:$0xf]
  %v73 = vld [vmem:[%s1 + $0x84] sm:$0xf]
  %v74 = vld [vmem:[%s1 + $0x90] sm:$0xf]
  %v75 = vld [vmem:[%s1 + $0x9c] sm:$0xf]
  %v76 = vld [vmem:[%s1 + $0xa8] sm:$0xf]
  %v77 = vld [vmem:[%s1 + $0xb4] sm:$0xf]
  %v94 = vunpack.c.l.b16 %v62
  %v95 = vunpack.c.l.b16 %v63
  %v96 = vunpack.c.l.b16 %v64
  %v97 = vunpack.c.l.b16 %v65
  %v98 = vunpack.c.l.b16 %v66
  %v99 = vunpack.c.l.b16 %v67
  %v100 = vunpack.c.l.b16 %v68
  %v101 = vunpack.c.l.b16 %v69
  %v102 = vunpack.c.l.b16 %v70
  %v103 = vunpack.c.l.b16 %v71
  %v104 = vunpack.c.l.b16 %v72
  %v105 = vunpack.c.l.b16 %v73
  %v106 = vunpack.c.l.b16 %v74
  %v107 = vunpack.c.l.b16 %v75
  %v108 = vunpack.c.l.b16 %v76
  %v109 = vunpack.c.l.b16 %v77
  %v110 = vpack.c.b16 %v95, %v94
  %v111 = vpack.c.b16 %v97, %v96
  %v112 = vpack.c.b16 %v99, %v98
  %v113 = vpack.c.b16 %v101, %v100
  %v114 = vpack.c.b16 %v103, %v102
  %v115 = vpack.c.b16 %v105, %v104
  %v116 = vpack.c.b16 %v107, %v106
  %v117 = vpack.c.b16 %v109, %v108
  %126 = vmatprep.subr.bf16.mxu0 0
  %127 = vmatpush1.bf16.msra.mxu0 %v110
  %128 = vmatprep.subr.bf16.mxu0 0
  %129 = vmatpush1.bf16.msra.mxu0 %v111
  %130 = vmatprep.subr.bf16.mxu0 0
  %131 = vmatpush1.bf16.msra.mxu0 %v112
  %132 = vmatprep.subr.bf16.mxu0 0
  %133 = vmatpush1.bf16.msra.mxu0 %v113
  %134 = vmatprep.subr.bf16.mxu0 0
  %135 = vmatpush1.bf16.msra.mxu0 %v114
  %136 = vmatprep.subr.bf16.mxu0 0
  %137 = vmatpush1.bf16.msra.mxu0 %v115
  %138 = vmatprep.subr.bf16.mxu0 0
  %139 = vmatpush1.bf16.msra.mxu0 %v116
  %140 = vmatprep.subr.bf16.mxu0 0
  %141 = vmatpush1.bf16.msra.mxu0 %v117
  %142 = vmatprep.subr.bf16.mxu0 0
  %143 = vmatpush1.bf16.msra.mxu0 0
  %144 = vmatprep.subr.bf16.mxu0 0
  %145 = vmatpush1.bf16.msra.mxu0 0
  %146 = vmatprep.subr.bf16.mxu0 0
  %147 = vmatpush1.bf16.msra.mxu0 0
  %148 = vmatprep.subr.bf16.mxu0 0
  %149 = vmatpush1.bf16.msra.mxu0 0
  %150 = vmatprep.subr.bf16.mxu0 0
  %151 = vmatpush1.bf16.msra.mxu0 0
  %152 = vmatprep.subr.bf16.mxu0 0
  %153 = vmatpush1.bf16.msra.mxu0 0
  %154 = vmatprep.subr.bf16.mxu0 0
  %155 = vmatpush1.bf16.msra.mxu0 0
  %156 = vmatprep.subr.bf16.mxu0 0
  %157 = vmatpush1.bf16.msra.mxu0 0
  %158 = vmatprep.mubr.bf16.mxu0 0
  %159 = vmatmul.mubr.bf16.gmra.mrb[0].mxu0 %v54
  %v160 = vpop.f32.mrb[0].mxu0
  %v161 = vadd.f32 0.0, %v160
  %v162 = vpop.f32.mrb[0].mxu0
  %v163 = vpop.f32.mrb[0].mxu0
  %v164 = vadd.f32 0.0, %v163
  %v165 = vpop.f32.mrb[0].mxu0
  %166 = vmatprep.mubr.bf16.mxu0 0
  %167 = vmatmul.mubr.bf16.gmra.mrb[0].mxu0 %v55
  %v168 = vpop.f32.mrb[0].mxu0
  %v169 = vadd.f32 0.0, %v168
  %v170 = vpop.f32.mrb[0].mxu0
  %v171 = vpop.f32.mrb[0].mxu0
  %v172 = vadd.f32 0.0, %v171
  %v173 = vpop.f32.mrb[0].mxu0
  %174 = vmatprep.mubr.bf16.mxu0 0
  %175 = vmatmul.mubr.bf16.gmra.mrb[0].mxu0 %v56
  %v176 = vpop.f32.mrb[0].mxu0
  %v177 = vadd.f32 0.0, %v176
  %v178 = vpop.f32.mrb[0].mxu0
  %v179 = vpop.f32.mrb[0].mxu0
  %v180 = vadd.f32 0.0, %v179
  %v181 = vpop.f32.mrb[0].mxu0
  %182 = vmatprep.mubr.bf16.mxu0 0
  %183 = vmatmul.mubr.bf16.gmra.mrb[0].mxu0 %v57
  %v184 = vpop.f32.mrb[0].mxu0
  %v185 = vadd.f32 0.0, %v184
  %v186 = vpop.f32.mrb[0].mxu0
  %v187 = vpop.f32.mrb[0].mxu0
  %v188 = vadd.f32 0.0, %v187
  %v189 = vpop.f32.mrb[0].mxu0
  %190 = vmatprep.mubr.bf16.mxu0 0
  %191 = vmatmul.mubr.bf16.gmra.mrb[0].mxu0 %v58
  %v192 = vpop.f32.mrb[0].mxu0
  %v193 = vadd.f32 0.0, %v192
  %v194 = vpop.f32.mrb[0].mxu0
  %v195 = vpop.f32.mrb[0].mxu0
  %v196 = vadd.f32 0.0, %v195
  %v197 = vpop.f32.mrb[0].mxu0
  %198 = vmatprep.mubr.bf16.mxu0 0
  %199 = vmatmul.mubr.bf16.gmra.mrb[0].mxu0 %v59
  %v200 = vpop.f32.mrb[0].mxu0
  %v201 = vadd.f32 0.0, %v200
  %v202 = vpop.f32.mrb[0].mxu0
  %v203 = vpop.f32.mrb[0].mxu0
  %v204 = vadd.f32 0.0, %v203
  %v205 = vpop.f32.mrb[0].mxu0
  %206 = vmatprep.mubr.bf16.mxu0 0
  %207 = vmatmul.mubr.bf16.gmra.mrb[0].mxu0 %v60
  %v208 = vpop.f32.mrb[0].mxu0
  %v209 = vadd.f32 0.0, %v208
  %v210 = vpop.f32.mrb[0].mxu0
  %v211 = vpop.f32.mrb[0].mxu0
  %v212 = vadd.f32 0.0, %v211
  %v213 = vpop.f32.mrb[0].mxu0
  %214 = vmatprep.mubr.bf16.mxu0 0
  %215 = vmatmul.mubr.bf16.gmra.mrb[0].mxu0 %v61
  %v216 = vpop.f32.mrb[0].mxu0
  %v217 = vadd.f32 0.0, %v216
  %v218 = vpop.f32.mrb[0].mxu0
  %v219 = vpop.f32.mrb[0].mxu0
  %v220 = vadd.f32 0.0, %v219
  %v221 = vpop.f32.mrb[0].mxu0
  %222 = vdwg.mxu0
  %v239 = vunpack.c.l.b16 %v18
  %v240 = vunpack.c.l.b16 %v19
  %v241 = vunpack.c.l.b16 %v20
  %v242 = vunpack.c.l.b16 %v21
  %v243 = vunpack.c.l.b16 %v22
  %v244 = vunpack.c.l.b16 %v23
  %v245 = vunpack.c.l.b16 %v24
  %v246 = vunpack.c.l.b16 %v25
  %v247 = vunpack.c.l.b16 %v26
  %v248 = vunpack.c.l.b16 %v27
  %v249 = vunpack.c.l.b16 %v28
  %v250 = vunpack.c.l.b16 %v29
  %v251 = vunpack.c.l.b16 %v30
  %v252 = vunpack.c.l.b16 %v31
  %v253 = vunpack.c.l.b16 %v32
  %v254 = vunpack.c.l.b16 %v33
  %v255 = vpack.c.b16 %v240, %v239
  %v256 = vpack.c.b16 %v242, %v241
  %v257 = vpack.c.b16 %v244, %v243
  %v258 = vpack.c.b16 %v246, %v245
  %v259 = vpack.c.b16 %v248, %v247
  %v260 = vpack.c.b16 %v250, %v249
  %v261 = vpack.c.b16 %v252, %v251
  %v262 = vpack.c.b16 %v254, %v253
  %v287 = vunpack.c.l.b16 %v34
  %v288 = vunpack.c.l.b16 %v35
  %v289 = vunpack.c.l.b16 %v36
  %v290 = vunpack.c.l.b16 %v37
  %v291 = vunpack.c.l.b16 %v38
  %v292 = vunpack.c.l.b16 %v39
  %v293 = vunpack.c.l.b16 %v40
  %v294 = vunpack.c.l.b16 %v41
  %v295 = vunpack.c.l.b16 %v42
  %v296 = vunpack.c.l.b16 %v43
  %v297 = vunpack.c.l.b16 %v44
  %v298 = vunpack.c.l.b16 %v45
  %v299 = vunpack.c.l.b16 %v46
  %v300 = vunpack.c.l.b16 %v47
  %v301 = vunpack.c.l.b16 %v48
  %v302 = vunpack.c.l.b16 %v49
  %v303 = vpack.c.b16 %v288, %v287
  %v304 = vpack.c.b16 %v290, %v289
  %v305 = vpack.c.b16 %v292, %v291
  %v306 = vpack.c.b16 %v294, %v293
  %v307 = vpack.c.b16 %v296, %v295
  %v308 = vpack.c.b16 %v298, %v297
  %v309 = vpack.c.b16 %v300, %v299
  %v310 = vpack.c.b16 %v302, %v301
  %319 = vmatprep.subr.bf16.mxu0 0
  %320 = vmatpush1.bf16.msra.mxu0 %v303
  %321 = vmatprep.subr.bf16.mxu0 0
  %322 = vmatpush1.bf16.msra.mxu0 %v304
  %323 = vmatprep.subr.bf16.mxu0 0
  %324 = vmatpush1.bf16.msra.mxu0 %v305
  %325 = vmatprep.subr.bf16.mxu0 0
  %326 = vmatpush1.bf16.msra.mxu0 %v306
  %327 = vmatprep.subr.bf16.mxu0 0
  %328 = vmatpush1.bf16.msra.mxu0 %v307
  %329 = vmatprep.subr.bf16.mxu0 0
  %330 = vmatpush1.bf16.msra.mxu0 %v308
  %331 = vmatprep.subr.bf16.mxu0 0
  %332 = vmatpush1.bf16.msra.mxu0 %v309
  %333 = vmatprep.subr.bf16.mxu0 0
  %334 = vmatpush1.bf16.msra.mxu0 %v310
  %335 = vmatprep.subr.bf16.mxu0 0
  %336 = vmatpush1.bf16.msra.mxu0 0
  %337 = vmatprep.subr.bf16.mxu0 0
  %338 = vmatpush1.bf16.msra.mxu0 0
  %339 = vmatprep.subr.bf16.mxu0 0
  %340 = vmatpush1.bf16.msra.mxu0 0
  %341 = vmatprep.subr.bf16.mxu0 0
  %342 = vmatpush1.bf16.msra.mxu0 0
  %343 = vmatprep.subr.bf16.mxu0 0
  %344 = vmatpush1.bf16.msra.mxu0 0
  %345 = vmatprep.subr.bf16.mxu0 0
  %346 = vmatpush1.bf16.msra.mxu0 0
  %347 = vmatprep.subr.bf16.mxu0 0
  %348 = vmatpush1.bf16.msra.mxu0 0
  %349 = vmatprep.subr.bf16.mxu0 0
  %350 = vmatpush1.bf16.msra.mxu0 0
  %351 = vmatprep.mubr.bf16.mxu0 0
  %352 = vmatmul.mubr.bf16.gmra.mrb[0].mxu0 %v255
  %v353 = vpop.f32.mrb[0].mxu0
  %v354 = vadd.f32 %v161, %v353
  %v355 = vpop.f32.mrb[0].mxu0
  %v356 = vpop.f32.mrb[0].mxu0
  %v357 = vadd.f32 %v164, %v356
  %v358 = vpop.f32.mrb[0].mxu0
  %359 = vmatprep.mubr.bf16.mxu0 0
  %360 = vmatmul.mubr.bf16.gmra.mrb[0].mxu0 %v256
  %v361 = vpop.f32.mrb[0].mxu0
  %v362 = vadd.f32 %v169, %v361
  %v363 = vpop.f32.mrb[0].mxu0
  %v364 = vpop.f32.mrb[0].mxu0
  %v365 = vadd.f32 %v172, %v364
  %v366 = vpop.f32.mrb[0].mxu0
  %367 = vmatprep.mubr.bf16.mxu0 0
  %368 = vmatmul.mubr.bf16.gmra.mrb[0].mxu0 %v257
  %v369 = vpop.f32.mrb[0].mxu0
  %v370 = vadd.f32 %v177, %v369
  %v371 = vpop.f32.mrb[0].mxu0
  %v372 = vpop.f32.mrb[0].mxu0
  %v373 = vadd.f32 %v180, %v372
  %v374 = vpop.f32.mrb[0].mxu0
  %375 = vmatprep.mubr.bf16.mxu0 0
  %376 = vmatmul.mubr.bf16.gmra.mrb[0].mxu0 %v258
  %v377 = vpop.f32.mrb[0].mxu0
  %v378 = vadd.f32 %v185, %v377
  %v379 = vpop.f32.mrb[0].mxu0
  %v380 = vpop.f32.mrb[0].mxu0
  %v381 = vadd.f32 %v188, %v380
  %v382 = vpop.f32.mrb[0].mxu0
  %383 = vmatprep.mubr.bf16.mxu0 0
  %384 = vmatmul.mubr.bf16.gmra.mrb[0].mxu0 %v259
  %v385 = vpop.f32.mrb[0].mxu0
  %v386 = vadd.f32 %v193, %v385
  %v387 = vpop.f32.mrb[0].mxu0
  %v388 = vpop.f32.mrb[0].mxu0
  %v389 = vadd.f32 %v196, %v388
  %v390 = vpop.f32.mrb[0].mxu0
  %391 = vmatprep.mubr.bf16.mxu0 0
  %392 = vmatmul.mubr.bf16.gmra.mrb[0].mxu0 %v260
  %v393 = vpop.f32.mrb[0].mxu0
  %v394 = vadd.f32 %v201, %v393
  %v395 = vpop.f32.mrb[0].mxu0
  %v396 = vpop.f32.mrb[0].mxu0
  %v397 = vadd.f32 %v204, %v396
  %v398 = vpop.f32.mrb[0].mxu0
  %399 = vmatprep.mubr.bf16.mxu0 0
  %400 = vmatmul.mubr.bf16.gmra.mrb[0].mxu0 %v261
  %v401 = vpop.f32.mrb[0].mxu0
  %v402 = vadd.f32 %v209, %v401
  %v403 = vpop.f32.mrb[0].mxu0
  %v404 = vpop.f32.mrb[0].mxu0
  %v405 = vadd.f32 %v212, %v404
  %v406 = vpop.f32.mrb[0].mxu0
  %407 = vmatprep.mubr.bf16.mxu0 0
  %408 = vmatmul.mubr.bf16.gmra.mrb[0].mxu0 %v262
  %v409 = vpop.f32.mrb[0].mxu0
  %v410 = vadd.f32 %v217, %v409
  %v411 = vpop.f32.mrb[0].mxu0
  %v412 = vpop.f32.mrb[0].mxu0
  %v413 = vadd.f32 %v220, %v412
  %v414 = vpop.f32.mrb[0].mxu0
  %415 = vdwg.mxu0
  %s416 = scalar_lea.vmem %s2, 32
  %v417 = vld [vmem:[%s416] sm:$0xff]
  %v418 = vld [vmem:[%s416 + $0x8] sm:$0xff]
  %v419 = vld [vmem:[%s416 + $0x10] sm:$0xff]
  %v420 = vld [vmem:[%s416 + $0x18] sm:$0xff]
  %v421 = vunpack.c.l.s8.bf16 %v417
  %v422 = vunpack.c.h.s8.bf16 %v417
  %v423 = vunpack.c.l.s8.bf16 %v418
  %v424 = vunpack.c.h.s8.bf16 %v418
  %v425 = vunpack.c.l.s8.bf16 %v419
  %v426 = vunpack.c.h.s8.bf16 %v419
  %v427 = vunpack.c.l.s8.bf16 %v420
  %v428 = vunpack.c.h.s8.bf16 %v420
  %v429 = vld [vmem:[%s1 + $0x4] sm:$0xf]
  %v430 = vld [vmem:[%s1 + $0x10] sm:$0xf]
  %v431 = vld [vmem:[%s1 + $0x1c] sm:$0xf]
  %v432 = vld [vmem:[%s1 + $0x28] sm:$0xf]
  %v433 = vld [vmem:[%s1 + $0x34] sm:$0xf]
  %v434 = vld [vmem:[%s1 + $0x40] sm:$0xf]
  %v435 = vld [vmem:[%s1 + $0x4c] sm:$0xf]
  %v436 = vld [vmem:[%s1 + $0x58] sm:$0xf]
  %v437 = vld [vmem:[%s1 + $0x64] sm:$0xf]
  %v438 = vld [vmem:[%s1 + $0x70] sm:$0xf]
  %v439 = vld [vmem:[%s1 + $0x7c] sm:$0xf]
  %v440 = vld [vmem:[%s1 + $0x88] sm:$0xf]
  %v441 = vld [vmem:[%s1 + $0x94] sm:$0xf]
  %v442 = vld [vmem:[%s1 + $0xa0] sm:$0xf]
  %v443 = vld [vmem:[%s1 + $0xac] sm:$0xf]
  %v444 = vld [vmem:[%s1 + $0xb8] sm:$0xf]
  %v461 = vunpack.c.l.b16 %v429
  %v462 = vunpack.c.l.b16 %v430
  %v463 = vunpack.c.l.b16 %v431
  %v464 = vunpack.c.l.b16 %v432
  %v465 = vunpack.c.l.b16 %v433
  %v466 = vunpack.c.l.b16 %v434
  %v467 = vunpack.c.l.b16 %v435
  %v468 = vunpack.c.l.b16 %v436
  %v469 = vunpack.c.l.b16 %v437
  %v470 = vunpack.c.l.b16 %v438
  %v471 = vunpack.c.l.b16 %v439
  %v472 = vunpack.c.l.b16 %v440
  %v473 = vunpack.c.l.b16 %v441
  %v474 = vunpack.c.l.b16 %v442
  %v475 = vunpack.c.l.b16 %v443
  %v476 = vunpack.c.l.b16 %v444
  %v477 = vpack.c.b16 %v462, %v461
  %v478 = vpack.c.b16 %v464, %v463
  %v479 = vpack.c.b16 %v466, %v465
  %v480 = vpack.c.b16 %v468, %v467
  %v481 = vpack.c.b16 %v470, %v469
  %v482 = vpack.c.b16 %v472, %v471
  %v483 = vpack.c.b16 %v474, %v473
  %v484 = vpack.c.b16 %v476, %v475
  %493 = vmatprep.subr.bf16.mxu0 0
  %494 = vmatpush1.bf16.msra.mxu0 %v477
  %495 = vmatprep.subr.bf16.mxu0 0
  %496 = vmatpush1.bf16.msra.mxu0 %v478
  %497 = vmatprep.subr.bf16.mxu0 0
  %498 = vmatpush1.bf16.msra.mxu0 %v479
  %499 = vmatprep.subr.bf16.mxu0 0
  %500 = vmatpush1.bf16.msra.mxu0 %v480
  %501 = vmatprep.subr.bf16.mxu0 0
  %502 = vmatpush1.bf16.msra.mxu0 %v481
  %503 = vmatprep.subr.bf16.mxu0 0
  %504 = vmatpush1.bf16.msra.mxu0 %v482
  %505 = vmatprep.subr.bf16.mxu0 0
  %506 = vmatpush1.bf16.msra.mxu0 %v483
  %507 = vmatprep.subr.bf16.mxu0 0
  %508 = vmatpush1.bf16.msra.mxu0 %v484
  %509 = vmatprep.subr.bf16.mxu0 0
  %510 = vmatpush1.bf16.msra.mxu0 0
  %511 = vmatprep.subr.bf16.mxu0 0
  %512 = vmatpush1.bf16.msra.mxu0 0
  %513 = vmatprep.subr.bf16.mxu0 0
  %514 = vmatpush1.bf16.msra.mxu0 0
  %515 = vmatprep.subr.bf16.mxu0 0
  %516 = vmatpush1.bf16.msra.mxu0 0
  %517 = vmatprep.subr.bf16.mxu0 0
  %518 = vmatpush1.bf16.msra.mxu0 0
  %519 = vmatprep.subr.bf16.mxu0 0
  %520 = vmatpush1.bf16.msra.mxu0 0
  %521 = vmatprep.subr.bf16.mxu0 0
  %522 = vmatpush1.bf16.msra.mxu0 0
  %523 = vmatprep.subr.bf16.mxu0 0
  %524 = vmatpush1.bf16.msra.mxu0 0
  %525 = vmatprep.mubr.bf16.mxu0 0
  %526 = vmatmul.mubr.bf16.gmra.mrb[0].mxu0 %v421
  %v527 = vpop.f32.mrb[0].mxu0
  %v528 = vadd.f32 0.0, %v527
  %v529 = vpop.f32.mrb[0].mxu0
  %v530 = vpop.f32.mrb[0].mxu0
  %v531 = vadd.f32 0.0, %v530
  %v532 = vpop.f32.mrb[0].mxu0
  %533 = vmatprep.mubr.bf16.mxu0 0
  %534 = vmatmul.mubr.bf16.gmra.mrb[0].mxu0 %v422
  %v535 = vpop.f32.mrb[0].mxu0
  %v536 = vadd.f32 0.0, %v535
  %v537 = vpop.f32.mrb[0].mxu0
  %v538 = vpop.f32.mrb[0].mxu0
  %v539 = vadd.f32 0.0, %v538
  %v540 = vpop.f32.mrb[0].mxu0
  %541 = vmatprep.mubr.bf16.mxu0 0
  %542 = vmatmul.mubr.bf16.gmra.mrb[0].mxu0 %v423
  %v543 = vpop.f32.mrb[0].mxu0
  %v544 = vadd.f32 0.0, %v543
  %v545 = vpop.f32.mrb[0].mxu0
  %v546 = vpop.f32.mrb[0].mxu0
  %v547 = vadd.f32 0.0, %v546
  %v548 = vpop.f32.mrb[0].mxu0
  %549 = vmatprep.mubr.bf16.mxu0 0
  %550 = vmatmul.mubr.bf16.gmra.mrb[0].mxu0 %v424
  %v551 = vpop.f32.mrb[0].mxu0
  %v552 = vadd.f32 0.0, %v551
  %v553 = vpop.f32.mrb[0].mxu0
  %v554 = vpop.f32.mrb[0].mxu0
  %v555 = vadd.f32 0.0, %v554
  %v556 = vpop.f32.mrb[0].mxu0
  %557 = vmatprep.mubr.bf16.mxu0 0
  %558 = vmatmul.mubr.bf16.gmra.mrb[0].mxu0 %v425
  %v559 = vpop.f32.mrb[0].mxu0
  %v560 = vadd.f32 0.0, %v559
  %v561 = vpop.f32.mrb[0].mxu0
  %v562 = vpop.f32.mrb[0].mxu0
  %v563 = vadd.f32 0.0, %v562
  %v564 = vpop.f32.mrb[0].mxu0
  %565 = vmatprep.mubr.bf16.mxu0 0
  %566 = vmatmul.mubr.bf16.gmra.mrb[0].mxu0 %v426
  %v567 = vpop.f32.mrb[0].mxu0
  %v568 = vadd.f32 0.0, %v567
  %v569 = vpop.f32.mrb[0].mxu0
  %v570 = vpop.f32.mrb[0].mxu0
  %v571 = vadd.f32 0.0, %v570
  %v572 = vpop.f32.mrb[0].mxu0
  %573 = vmatprep.mubr.bf16.mxu0 0
  %574 = vmatmul.mubr.bf16.gmra.mrb[0].mxu0 %v427
  %v575 = vpop.f32.mrb[0].mxu0
  %v576 = vadd.f32 0.0, %v575
  %v577 = vpop.f32.mrb[0].mxu0
  %v578 = vpop.f32.mrb[0].mxu0
  %v579 = vadd.f32 0.0, %v578
  %v580 = vpop.f32.mrb[0].mxu0
  %581 = vmatprep.mubr.bf16.mxu0 0
  %582 = vmatmul.mubr.bf16.gmra.mrb[0].mxu0 %v428
  %v583 = vpop.f32.mrb[0].mxu0
  %v584 = vadd.f32 0.0, %v583
  %v585 = vpop.f32.mrb[0].mxu0
  %v586 = vpop.f32.mrb[0].mxu0
  %v587 = vadd.f32 0.0, %v586
  %v588 = vpop.f32.mrb[0].mxu0
  %589 = vdwg.mxu0
  %v590 = vadd.f32 %v354, %v528
  %v591 = vadd.f32 %v357, %v531
  %v592 = vadd.f32 %v362, %v536
  %v593 = vadd.f32 %v365, %v539
  %v594 = vadd.f32 %v370, %v544
  %v595 = vadd.f32 %v373, %v547
  %v596 = vadd.f32 %v378, %v552
  %v597 = vadd.f32 %v381, %v555
  %v598 = vadd.f32 %v386, %v560
  %v599 = vadd.f32 %v389, %v563
  %v600 = vadd.f32 %v394, %v568
  %v601 = vadd.f32 %v397, %v571
  %v602 = vadd.f32 %v402, %v576
  %v603 = vadd.f32 %v405, %v579
  %v604 = vadd.f32 %v410, %v584
  %v605 = vadd.f32 %v413, %v587
  %s606 = scalar_lea.vmem %s2, 64
  %v607 = vld [vmem:[%s606] sm:$0xff]
  %v608 = vld [vmem:[%s606 + $0x8] sm:$0xff]
  %v609 = vld [vmem:[%s606 + $0x10] sm:$0xff]
  %v610 = vld [vmem:[%s606 + $0x18] sm:$0xff]
  %v611 = vunpack.c.l.s8.bf16 %v607
  %v612 = vunpack.c.h.s8.bf16 %v607
  %v613 = vunpack.c.l.s8.bf16 %v608
  %v614 = vunpack.c.h.s8.bf16 %v608
  %v615 = vunpack.c.l.s8.bf16 %v609
  %v616 = vunpack.c.h.s8.bf16 %v609
  %v617 = vunpack.c.l.s8.bf16 %v610
  %v618 = vunpack.c.h.s8.bf16 %v610
  %v619 = vld [vmem:[%s1 + $0x8] sm:$0xf]
  %v620 = vld [vmem:[%s1 + $0x14] sm:$0xf]
  %v621 = vld [vmem:[%s1 + $0x20] sm:$0xf]
  %v622 = vld [vmem:[%s1 + $0x2c] sm:$0xf]
  %v623 = vld [vmem:[%s1 + $0x38] sm:$0xf]
  %v624 = vld [vmem:[%s1 + $0x44] sm:$0xf]
  %v625 = vld [vmem:[%s1 + $0x50] sm:$0xf]
  %v626 = vld [vmem:[%s1 + $0x5c] sm:$0xf]
  %v627 = vld [vmem:[%s1 + $0x68] sm:$0xf]
  %v628 = vld [vmem:[%s1 + $0x74] sm:$0xf]
  %v629 = vld [vmem:[%s1 + $0x80] sm:$0xf]
  %v630 = vld [vmem:[%s1 + $0x8c] sm:$0xf]
  %v631 = vld [vmem:[%s1 + $0x98] sm:$0xf]
  %v632 = vld [vmem:[%s1 + $0xa4] sm:$0xf]
  %v633 = vld [vmem:[%s1 + $0xb0] sm:$0xf]
  %v634 = vld [vmem:[%s1 + $0xbc] sm:$0xf]
  %v651 = vunpack.c.l.b16 %v619
  %v652 = vunpack.c.l.b16 %v620
  %v653 = vunpack.c.l.b16 %v621
  %v654 = vunpack.c.l.b16 %v622
  %v655 = vunpack.c.l.b16 %v623
  %v656 = vunpack.c.l.b16 %v624
  %v657 = vunpack.c.l.b16 %v625
  %v658 = vunpack.c.l.b16 %v626
  %v659 = vunpack.c.l.b16 %v627
  %v660 = vunpack.c.l.b16 %v628
  %v661 = vunpack.c.l.b16 %v629
  %v662 = vunpack.c.l.b16 %v630
  %v663 = vunpack.c.l.b16 %v631
  %v664 = vunpack.c.l.b16 %v632
  %v665 = vunpack.c.l.b16 %v633
  %v666 = vunpack.c.l.b16 %v634
  %v667 = vpack.c.b16 %v652, %v651
  %v668 = vpack.c.b16 %v654, %v653
  %v669 = vpack.c.b16 %v656, %v655
  %v670 = vpack.c.b16 %v658, %v657
  %v671 = vpack.c.b16 %v660, %v659
  %v672 = vpack.c.b16 %v662, %v661
  %v673 = vpack.c.b16 %v664, %v663
  %v674 = vpack.c.b16 %v666, %v665
  %683 = vmatprep.subr.bf16.mxu0 0
  %684 = vmatpush1.bf16.msra.mxu0 %v667
  %685 = vmatprep.subr.bf16.mxu0 0
  %686 = vmatpush1.bf16.msra.mxu0 %v668
  %687 = vmatprep.subr.bf16.mxu0 0
  %688 = vmatpush1.bf16.msra.mxu0 %v669
  %689 = vmatprep.subr.bf16.mxu0 0
  %690 = vmatpush1.bf16.msra.mxu0 %v670
  %691 = vmatprep.subr.bf16.mxu0 0
  %692 = vmatpush1.bf16.msra.mxu0 %v671
  %693 = vmatprep.subr.bf16.mxu0 0
  %694 = vmatpush1.bf16.msra.mxu0 %v672
  %695 = vmatprep.subr.bf16.mxu0 0
  %696 = vmatpush1.bf16.msra.mxu0 %v673
  %697 = vmatprep.subr.bf16.mxu0 0
  %698 = vmatpush1.bf16.msra.mxu0 %v674
  %699 = vmatprep.subr.bf16.mxu0 0
  %700 = vmatpush1.bf16.msra.mxu0 0
  %701 = vmatprep.subr.bf16.mxu0 0
  %702 = vmatpush1.bf16.msra.mxu0 0
  %703 = vmatprep.subr.bf16.mxu0 0
  %704 = vmatpush1.bf16.msra.mxu0 0
  %705 = vmatprep.subr.bf16.mxu0 0
  %706 = vmatpush1.bf16.msra.mxu0 0
  %707 = vmatprep.subr.bf16.mxu0 0
  %708 = vmatpush1.bf16.msra.mxu0 0
  %709 = vmatprep.subr.bf16.mxu0 0
  %710 = vmatpush1.bf16.msra.mxu0 0
  %711 = vmatprep.subr.bf16.mxu0 0
  %712 = vmatpush1.bf16.msra.mxu0 0
  %713 = vmatprep.subr.bf16.mxu0 0
  %714 = vmatpush1.bf16.msra.mxu0 0
  %715 = vmatprep.mubr.bf16.mxu0 0
  %716 = vmatmul.mubr.bf16.gmra.mrb[0].mxu0 %v611
  %v717 = vpop.f32.mrb[0].mxu0
  %v718 = vadd.f32 0.0, %v717
  %v719 = vpop.f32.mrb[0].mxu0
  %v720 = vpop.f32.mrb[0].mxu0
  %v721 = vadd.f32 0.0, %v720
  %v722 = vpop.f32.mrb[0].mxu0
  %723 = vmatprep.mubr.bf16.mxu0 0
  %724 = vmatmul.mubr.bf16.gmra.mrb[0].mxu0 %v612
  %v725 = vpop.f32.mrb[0].mxu0
  %v726 = vadd.f32 0.0, %v725
  %v727 = vpop.f32.mrb[0].mxu0
  %v728 = vpop.f32.mrb[0].mxu0
  %v729 = vadd.f32 0.0, %v728
  %v730 = vpop.f32.mrb[0].mxu0
  %731 = vmatprep.mubr.bf16.mxu0 0
  %732 = vmatmul.mubr.bf16.gmra.mrb[0].mxu0 %v613
  %v733 = vpop.f32.mrb[0].mxu0
  %v734 = vadd.f32 0.0, %v733
  %v735 = vpop.f32.mrb[0].mxu0
  %v736 = vpop.f32.mrb[0].mxu0
  %v737 = vadd.f32 0.0, %v736
  %v738 = vpop.f32.mrb[0].mxu0
  %739 = vmatprep.mubr.bf16.mxu0 0
  %740 = vmatmul.mubr.bf16.gmra.mrb[0].mxu0 %v614
  %v741 = vpop.f32.mrb[0].mxu0
  %v742 = vadd.f32 0.0, %v741
  %v743 = vpop.f32.mrb[0].mxu0
  %v744 = vpop.f32.mrb[0].mxu0
  %v745 = vadd.f32 0.0, %v744
  %v746 = vpop.f32.mrb[0].mxu0
  %747 = vmatprep.mubr.bf16.mxu0 0
  %748 = vmatmul.mubr.bf16.gmra.mrb[0].mxu0 %v615
  %v749 = vpop.f32.mrb[0].mxu0
  %v750 = vadd.f32 0.0, %v749
  %v751 = vpop.f32.mrb[0].mxu0
  %v752 = vpop.f32.mrb[0].mxu0
  %v753 = vadd.f32 0.0, %v752
  %v754 = vpop.f32.mrb[0].mxu0
  %755 = vmatprep.mubr.bf16.mxu0 0
  %756 = vmatmul.mubr.bf16.gmra.mrb[0].mxu0 %v616
  %v757 = vpop.f32.mrb[0].mxu0
  %v758 = vadd.f32 0.0, %v757
  %v759 = vpop.f32.mrb[0].mxu0
  %v760 = vpop.f32.mrb[0].mxu0
  %v761 = vadd.f32 0.0, %v760
  %v762 = vpop.f32.mrb[0].mxu0
  %763 = vmatprep.mubr.bf16.mxu0 0
  %764 = vmatmul.mubr.bf16.gmra.mrb[0].mxu0 %v617
  %v765 = vpop.f32.mrb[0].mxu0
  %v766 = vadd.f32 0.0, %v765
  %v767 = vpop.f32.mrb[0].mxu0
  %v768 = vpop.f32.mrb[0].mxu0
  %v769 = vadd.f32 0.0, %v768
  %v770 = vpop.f32.mrb[0].mxu0
  %771 = vmatprep.mubr.bf16.mxu0 0
  %772 = vmatmul.mubr.bf16.gmra.mrb[0].mxu0 %v618
  %v773 = vpop.f32.mrb[0].mxu0
  %v774 = vadd.f32 0.0, %v773
  %v775 = vpop.f32.mrb[0].mxu0
  %v776 = vpop.f32.mrb[0].mxu0
  %v777 = vadd.f32 0.0, %v776
  %v778 = vpop.f32.mrb[0].mxu0
  %779 = vdwg.mxu0
  %v780 = vadd.f32 %v590, %v718
  %v781 = vadd.f32 %v591, %v721
  %v782 = vadd.f32 %v592, %v726
  %v783 = vadd.f32 %v593, %v729
  %v784 = vadd.f32 %v594, %v734
  %v785 = vadd.f32 %v595, %v737
  %v786 = vadd.f32 %v596, %v742
  %v787 = vadd.f32 %v597, %v745
  %v788 = vadd.f32 %v598, %v750
  %v789 = vadd.f32 %v599, %v753
  %v790 = vadd.f32 %v600, %v758
  %v791 = vadd.f32 %v601, %v761
  %v792 = vadd.f32 %v602, %v766
  %v793 = vadd.f32 %v603, %v769
  %v794 = vadd.f32 %v604, %v774
  %v795 = vadd.f32 %v605, %v777
  %v796 = vmax.f32 %v780, 0.0
  %v797 = vmax.f32 %v781, 0.0
  %v798 = vmax.f32 %v782, 0.0
  %v799 = vmax.f32 %v783, 0.0
  %v800 = vmax.f32 %v784, 0.0
  %v801 = vmax.f32 %v785, 0.0
  %v802 = vmax.f32 %v786, 0.0
  %v803 = vmax.f32 %v787, 0.0
  %v804 = vmax.f32 %v788, 0.0
  %v805 = vmax.f32 %v789, 0.0
  %v806 = vmax.f32 %v790, 0.0
  %v807 = vmax.f32 %v791, 0.0
  %v808 = vmax.f32 %v792, 0.0
  %v809 = vmax.f32 %v793, 0.0
  %v810 = vmax.f32 %v794, 0.0
  %v811 = vmax.f32 %v795, 0.0
  %v812 = vpack.c.bf16 %v797, %v796
  %v813 = vpack.c.bf16 %v799, %v798
  %v814 = vpack.c.bf16 %v801, %v800
  %v815 = vpack.c.bf16 %v803, %v802
  %v816 = vpack.c.bf16 %v805, %v804
  %v817 = vpack.c.bf16 %v807, %v806
  %v818 = vpack.c.bf16 %v809, %v808
  %v819 = vpack.c.bf16 %v811, %v810
  %v828 = vunpack.c.l.b16 %v812
  %v829 = vunpack.c.h.b16 %v812
  %v830 = vunpack.c.l.b16 %v813
  %v831 = vunpack.c.h.b16 %v813
  %v832 = vunpack.c.l.b16 %v814
  %v833 = vunpack.c.h.b16 %v814
  %v834 = vunpack.c.l.b16 %v815
  %v835 = vunpack.c.h.b16 %v815
  %v836 = vunpack.c.l.b16 %v816
  %v837 = vunpack.c.h.b16 %v816
  %v838 = vunpack.c.l.b16 %v817
  %v839 = vunpack.c.h.b16 %v817
  %v840 = vunpack.c.l.b16 %v818
  %v841 = vunpack.c.h.b16 %v818
  %v842 = vunpack.c.l.b16 %v819
  %v843 = vunpack.c.h.b16 %v819
  %v844 = vpack.c.b16 %v828, %v828
  %v845 = vpack.c.b16 %v829, %v829
  %v846 = vpack.c.b16 %v830, %v830
  %v847 = vpack.c.b16 %v831, %v831
  %v848 = vpack.c.b16 %v832, %v832
  %v849 = vpack.c.b16 %v833, %v833
  %v850 = vpack.c.b16 %v834, %v834
  %v851 = vpack.c.b16 %v835, %v835
  %v852 = vpack.c.b16 %v836, %v836
  %v853 = vpack.c.b16 %v837, %v837
  %v854 = vpack.c.b16 %v838, %v838
  %v855 = vpack.c.b16 %v839, %v839
  %v856 = vpack.c.b16 %v840, %v840
  %v857 = vpack.c.b16 %v841, %v841
  %v858 = vpack.c.b16 %v842, %v842
  %v859 = vpack.c.b16 %v843, %v843
  %876 = vst [vmem:[%s4] sm:$0xf] %v844
  %877 = vst [vmem:[%s4 + $0x4] sm:$0xf] %v845
  %878 = vst [vmem:[%s4 + $0x8] sm:$0xf] %v846
  %879 = vst [vmem:[%s4 + $0xc] sm:$0xf] %v847
  %880 = vst [vmem:[%s4 + $0x10] sm:$0xf] %v848
  %881 = vst [vmem:[%s4 + $0x14] sm:$0xf] %v849
  %882 = vst [vmem:[%s4 + $0x18] sm:$0xf] %v850
  %883 = vst [vmem:[%s4 + $0x1c] sm:$0xf] %v851
  %884 = vst [vmem:[%s4 + $0x20] sm:$0xf] %v852
  %885 = vst [vmem:[%s4 + $0x24] sm:$0xf] %v853
  %886 = vst [vmem:[%s4 + $0x28] sm:$0xf] %v854
  %887 = vst [vmem:[%s4 + $0x2c] sm:$0xf] %v855
  %888 = vst [vmem:[%s4 + $0x30] sm:$0xf] %v856
  %889 = vst [vmem:[%s4 + $0x34] sm:$0xf] %v857
  %890 = vst [vmem:[%s4 + $0x38] sm:$0xf] %v858
  %891 = vst [vmem:[%s4 + $0x3c] sm:$0xf] %v859
  // Predicated region
  $region18: #{graph_feature_extractor.8} parent=0 // pred_check
    _
  $region19: #{graph_feature_extractor.8} parent=0 // pred_check_branch
    %893 = sbr.rel (0) target = $region21
  $region20: #{graph_feature_extractor.8} parent=0 // pred_region
    _
  $region21: #{graph_feature_extractor.8} parent=0 // pred_fallthru
    _
  // Predicated region
  $region22: #{graph_feature_extractor.8} parent=0 // pred_check
    _
  $region23: #{graph_feature_extractor.8} parent=0 // pred_check_branch
    %895 = sbr.rel (0) target = $region25
  $region24: #{graph_feature_extractor.8} parent=0 // pred_region
    _
  $region25: #{graph_feature_extractor.8} parent=0 // pred_fallthru
    _

</llo_original>
